<compile_context>
chip_gen: v7x
topology: tpu7x:2x2x1
jax: 0.10.0
libtpu: 0.0.40
codegen_flags: <defaults>
</compile_context>

<pallas_src>
import functools

import jax
import jax.numpy as jnp
from jax.experimental import pallas as pl
from jax.experimental.pallas import tpu as pltpu

EPS = 1e-5


def _discriminator_kernel(B_total,
                          x_ref,
                          w1_ref, b1_ref, g1_ref, be1_ref,
                          w2_ref, b2_ref, g2_ref, be2_ref,
                          w3_ref, b3_ref,
                          o_ref,
                          s1_1, s2_1, s1_2, s2_2):
    """grid = (phase, batch_tile); phase is the outer (slow) axis.

    Scratch (persists across grid steps):
      s1_1/s2_1 : BN1 sum / sum-of-squares, repurposed to scale / shift after
                  phase 0 completes.
      s1_2/s2_2 : same for BN2 (finalized after phase 1 completes).
    """
    phase = pl.program_id(0)
    tile = pl.program_id(1)
    inv_B = jnp.float32(1.0 / B_total)

    x = x_ref[...].astype(jnp.float32)

    def lin1():
        return jnp.dot(x, w1_ref[...].astype(jnp.float32),
                       preferred_element_type=jnp.float32) + b1_ref[...]

    def lin2(a1):
        return jnp.dot(a1, w2_ref[...],
                       preferred_element_type=jnp.float32) + b2_ref[...]

    # -------- Phase 0: accumulate full-batch BN1 statistics --------
    @pl.when(phase == 0)
    def _phase0():
        @pl.when(tile == 0)
        def _init():
            s1_1[...] = jnp.zeros_like(s1_1)
            s2_1[...] = jnp.zeros_like(s2_1)

        h1 = lin1()
        s1_1[...] += jnp.sum(h1, axis=0, keepdims=True)
        s2_1[...] += jnp.sum(h1 * h1, axis=0, keepdims=True)
        # Keep the (revisited) output block initialized; overwritten in phase 2.
        o_ref[...] = jnp.zeros_like(o_ref)

    # -------- Phase 1: accumulate full-batch BN2 statistics --------
    @pl.when(phase == 1)
    def _phase1():
        @pl.when(tile == 0)
        def _finalize_bn1():
            # Single-pass stats: var = E[h^2] - mu^2 (biased, training-mode BN).
            mu = s1_1[...] * inv_B
            var = jnp.maximum(s2_1[...] * inv_B - mu * mu, 0.0)  # cancellation guard
            scale = g1_ref[...] * jax.lax.rsqrt(var + EPS)
            s1_1[...] = scale                        # repurpose: BN1 scale
            s2_1[...] = be1_ref[...] - mu * scale    # repurpose: BN1 shift
            s1_2[...] = jnp.zeros_like(s1_2)
            s2_2[...] = jnp.zeros_like(s2_2)

        a1 = jnp.maximum(lin1() * s1_1[...] + s2_1[...], 0.0)
        h2 = lin2(a1)
        s1_2[...] += jnp.sum(h2, axis=0, keepdims=True)
        s2_2[...] += jnp.sum(h2 * h2, axis=0, keepdims=True)
        o_ref[...] = jnp.zeros_like(o_ref)

    # -------- Phase 2: apply full network, write tanh output --------
    @pl.when(phase == 2)
    def _phase2():
        @pl.when(tile == 0)
        def _finalize_bn2():
            mu = s1_2[...] * inv_B
            var = jnp.maximum(s2_2[...] * inv_B - mu * mu, 0.0)
            scale = g2_ref[...] * jax.lax.rsqrt(var + EPS)
            s1_2[...] = scale                        # BN2 scale
            s2_2[...] = be2_ref[...] - mu * scale    # BN2 shift

        a1 = jnp.maximum(lin1() * s1_1[...] + s2_1[...], 0.0)
        a2 = jnp.maximum(lin2(a1) * s1_2[...] + s2_2[...], 0.0)
        logits = jnp.dot(a2, w3_ref[...],
                         preferred_element_type=jnp.float32) + b3_ref[...]
        o_ref[...] = jnp.tanh(logits).astype(o_ref.dtype)


def _pick_tile_batch(B, max_tile=1024):
    """Largest batch tile that satisfies the (8,128) block constraint."""
    if B <= max_tile:
        return B
    for tb in range((max_tile // 8) * 8, 0, -8):
        if B % tb == 0:
            return tb
    return B  # no 8-aligned divisor: fall back to a single block


def _padded_bytes(shape, itemsize=4):
    """VMEM footprint of one buffer after sublane/lane padding."""
    r, c = (1, shape[0]) if len(shape) == 1 else shape[-2:]
    return ((r + 7) // 8) * 8 * ((c + 127) // 128) * 128 * itemsize


def dense_nn_discriminator(x, params, *, tile_batch=None, input_dtype=None):
    """x: (B, channels) float32 -> (B, 1) float32 (tanh of logits)."""
    (w1, b1, g1, be1, w2, b2, g2, be2, w3, b3) = params
    B, in_dim = x.shape
    assert in_dim == w1.shape[0]
    f1 = w1.shape[1]  # 40
    f2 = w2.shape[1]  # 20

    # Optional: bf16 input stream on v6e/v7x halves the dominant HBM traffic.
    # BN / elementwise math stays f32 inside the kernel (safe on v5e too).
    if input_dtype is not None:
        x = x.astype(input_dtype)

    TB = tile_batch if tile_batch is not None else _pick_tile_batch(B)
    assert B % TB == 0 and (TB == B or TB % 8 == 0), (B, TB)
    num_tiles = B // TB

    VMEM = pltpu.MemorySpace.VMEM

    def tiled(shape):          # streamed over the batch-tile grid axis
        return pl.BlockSpec(shape, lambda p, j: (j, 0), memory_space=VMEM)

    def resident(shape):       # whole-array VMEM resident (constant index_map)
        return pl.BlockSpec(shape, lambda p, j: (0, 0), memory_space=VMEM)

    in_specs = [
        tiled((TB, in_dim)),
        resident(w1.shape), resident(b1.shape), resident(g1.shape), resident(be1.shape),
        resident(w2.shape), resident(b2.shape), resident(g2.shape), resident(be2.shape),
        resident(w3.shape), resident(b3.shape),
    ]
    out_specs = tiled((TB, 1))
    # NOTE: the (B, 1) output lowers to masked lane stores; it is only 4 useful
    # bytes/row either way, so we keep TB large rather than pad the lane dim.

    # VMEM budget: padded buffers, x2 for BlockSpec double-buffering, clamped
    # to fit the v7x 64 MiB/TC physical VMEM (and be generous on v5e/v6e).
    shapes = [(TB, in_dim), (TB, 1),
              w1.shape, b1.shape, g1.shape, be1.shape,
              w2.shape, b2.shape, g2.shape, be2.shape,
              w3.shape, b3.shape]
    est = 2 * sum(_padded_bytes(s) for s in shapes)
    est += sum(_padded_bytes(s) for s in [(1, f1), (1, f1), (1, f2), (1, f2)])
    vmem_limit = int(min(max(4 * est, 16 << 20), 48 << 20))

    kernel = functools.partial(_discriminator_kernel, B)

    return pl.pallas_call(
        kernel,
        out_shape=jax.ShapeDtypeStruct((B, 1), jnp.float32),
        grid_spec=pltpu.PrefetchScalarGridSpec(
            num_scalar_prefetch=0,
            grid=(3, num_tiles),          # (phase, batch tile) — phase outer
            in_specs=in_specs,
            out_specs=out_specs,
            scratch_shapes=[
                pltpu.VMEM((1, f1), jnp.float32),   # BN1 sum   -> scale
                pltpu.VMEM((1, f1), jnp.float32),   # BN1 sumsq -> shift
                pltpu.VMEM((1, f2), jnp.float32),   # BN2 sum   -> scale
                pltpu.VMEM((1, f2), jnp.float32),   # BN2 sumsq -> shift
            ]),
        compiler_params=pltpu.CompilerParams(
            # Both axes are sequential: BN statistics accumulate across batch
            # tiles and the three phases must run in order. (On v7x a megacore
            # split would need a separate apply-only call with a "parallel"
            # batch axis plus a cross-core stats merge.)
            dimension_semantics=("arbitrary", "arbitrary"),
            vmem_limit_bytes=vmem_limit,
        ),
    )(x, w1, b1, g1, be1, w2, b2, g2, be2, w3, b3)


def init_params(key, channels):
    """Deterministic synthetic parameters with the module's shapes.

    Linear weights are stored (in_features, out_features), i.e. transposed
    relative to PyTorch's (out, in) layout; BN gamma=1, beta=0 (PyTorch init).
    """
    k = jax.random.split(key, 6)

    def lin(kw, kb, fan_in, fan_out):
        bound = 1.0 / float(fan_in) ** 0.5
        w = jax.random.uniform(kw, (fan_in, fan_out), jnp.float32, -bound, bound)
        b = jax.random.uniform(kb, (1, fan_out), jnp.float32, -bound, bound)
        return w, b

    w1, b1 = lin(k[0], k[1], channels, 40)
    w2, b2 = lin(k[2], k[3], 40, 20)
    w3, b3 = lin(k[4], k[5], 20, 1)
    g1, be1 = jnp.ones((1, 40), jnp.float32), jnp.zeros((1, 40), jnp.float32)
    g2, be2 = jnp.ones((1, 20), jnp.float32), jnp.zeros((1, 20), jnp.float32)
    return (w1, b1, g1, be1, w2, b2, g2, be2, w3, b3)


def _reference(x, params):
    """Pure-JAX reference (two-pass BN stats) for correctness checking."""
    (w1, b1, g1, be1, w2, b2, g2, be2, w3, b3) = params

    def bn(h, g, be):
        mu = jnp.mean(h, axis=0, keepdims=True)
        var = jnp.mean((h - mu) ** 2, axis=0, keepdims=True)  # biased (training)
        return (h - mu) / jnp.sqrt(var + EPS) * g + be

    h = jnp.maximum(bn(x @ w1 + b1, g1, be1), 0.0)
    h = jnp.maximum(bn(h @ w2 + b2, g2, be2), 0.0)
    return jnp.tanh(h @ w3 + b3)


if __name__ == "__main__":
    channels = 4
    batch = 64

    key = jax.random.PRNGKey(0)
    kx, kp = jax.random.split(key)
    x = jax.random.normal(kx, (batch, channels), jnp.float32)
    params = init_params(kp, channels)

    ref = _reference(x, params)

    # Multi-tile path: exercises streaming full-batch BN stats across 4 tiles.
    out_tiled = jax.block_until_ready(
        dense_nn_discriminator(x, params, tile_batch=16))
    # Auto tile (TB == B): single-block path.
    out_block = jax.block_until_ready(dense_nn_discriminator(x, params))

    assert out_tiled.shape == (batch, 1), out_tiled.shape
    assert jnp.allclose(out_tiled, ref, atol=1e-4, rtol=1e-4), float(
        jnp.max(jnp.abs(out_tiled - ref)))
    assert jnp.allclose(out_block, ref, atol=1e-4, rtol=1e-4), float(
        jnp.max(jnp.abs(out_block - ref)))

    print("KERNEL_OK")
</pallas_src>

<mosaic_0001>
module attributes {stable_mosaic.version = 11 : i64} {
  func.func @_discriminator_kernel(%arg0: i32, %arg1: i32, %arg2: memref<16x4xf32, #tpu.memory_space<vmem>>, %arg3: memref<4x40xf32, #tpu.memory_space<vmem>>, %arg4: memref<1x40xf32, #tpu.memory_space<vmem>>, %arg5: memref<1x40xf32, #tpu.memory_space<vmem>>, %arg6: memref<1x40xf32, #tpu.memory_space<vmem>>, %arg7: memref<40x20xf32, #tpu.memory_space<vmem>>, %arg8: memref<1x20xf32, #tpu.memory_space<vmem>>, %arg9: memref<1x20xf32, #tpu.memory_space<vmem>>, %arg10: memref<1x20xf32, #tpu.memory_space<vmem>>, %arg11: memref<20x1xf32, #tpu.memory_space<vmem>>, %arg12: memref<1x1xf32, #tpu.memory_space<vmem>>, %arg13: memref<16x1xf32, #tpu.memory_space<vmem>>, %arg14: memref<1x40xf32, #tpu.memory_space<vmem>>, %arg15: memref<1x40xf32, #tpu.memory_space<vmem>>, %arg16: memref<1x20xf32, #tpu.memory_space<vmem>>, %arg17: memref<1x20xf32, #tpu.memory_space<vmem>>) attributes {dimension_semantics = [#tpu.dimension_semantics<arbitrary>, #tpu.dimension_semantics<arbitrary>], iteration_bounds = array<i64: 3, 4>, scalar_prefetch = 0 : i64, scratch_operands = 4 : i64, tpu.core_type = #tpu.core_type<tc>, window_params = [{transform_indices = @transform_0, window_bounds = array<i64: 16, 4>}, {pipeline_mode = #tpu.pipeline_mode<synchronous>, transform_indices = @transform_1, window_bounds = array<i64: 4, 40>}, {pipeline_mode = #tpu.pipeline_mode<synchronous>, transform_indices = @transform_2, window_bounds = array<i64: 1, 40>}, {pipeline_mode = #tpu.pipeline_mode<synchronous>, transform_indices = @transform_3, window_bounds = array<i64: 1, 40>}, {pipeline_mode = #tpu.pipeline_mode<synchronous>, transform_indices = @transform_4, window_bounds = array<i64: 1, 40>}, {pipeline_mode = #tpu.pipeline_mode<synchronous>, transform_indices = @transform_5, window_bounds = array<i64: 40, 20>}, {pipeline_mode = #tpu.pipeline_mode<synchronous>, transform_indices = @transform_6, window_bounds = array<i64: 1, 20>}, {pipeline_mode = #tpu.pipeline_mode<synchronous>, transform_indices = @transform_7, window_bounds = array<i64: 1, 20>}, {pipeline_mode = #tpu.pipeline_mode<synchronous>, transform_indices = @transform_8, window_bounds = array<i64: 1, 20>}, {pipeline_mode = #tpu.pipeline_mode<synchronous>, transform_indices = @transform_9, window_bounds = array<i64: 20, 1>}, {pipeline_mode = #tpu.pipeline_mode<synchronous>, transform_indices = @transform_10, window_bounds = array<i64: 1, 1>}, {transform_indices = @transform_11, window_bounds = array<i64: 16, 1>}]} {
    %c0 = arith.constant 0 : index
    %c0_0 = arith.constant 0 : index
    %0 = vector.load %arg2[%c0, %c0_0] : memref<16x4xf32, #tpu.memory_space<vmem>>, vector<16x4xf32>
    %c0_i32 = arith.constant 0 : i32
    %1 = arith.cmpi eq, %arg0, %c0_i32 : i32
    %2 = arith.extui %1 : i1 to i32
    %c0_i32_1 = arith.constant 0 : i32
    %3 = arith.cmpi ne, %2, %c0_i32_1 : i32
    scf.if %3 {
      %c0_i32_5 = arith.constant 0 : i32
      %10 = arith.cmpi eq, %arg1, %c0_i32_5 : i32
      %11 = arith.extui %10 : i1 to i32
      %c0_i32_6 = arith.constant 0 : i32
      %12 = arith.cmpi ne, %11, %c0_i32_6 : i32
      scf.if %12 {
        %cst_25 = arith.constant 0.000000e+00 : f32
        %31 = vector.broadcast %cst_25 : f32 to vector<1x40xf32>
        %c0_26 = arith.constant 0 : index
        %c0_27 = arith.constant 0 : index
        %32 = vector.load %arg14[%c0_26, %c0_27] : memref<1x40xf32, #tpu.memory_space<vmem>>, vector<1x40xf32>
        tpu.vector_store %arg14[%c0_26, %c0_27], %31 {strides = array<i32>} : memref<1x40xf32, #tpu.memory_space<vmem>>, vector<1x40xf32>,
        %cst_28 = arith.constant 0.000000e+00 : f32
        %33 = vector.broadcast %cst_28 : f32 to vector<1x40xf32>
        %c0_29 = arith.constant 0 : index
        %c0_30 = arith.constant 0 : index
        %34 = vector.load %arg15[%c0_29, %c0_30] : memref<1x40xf32, #tpu.memory_space<vmem>>, vector<1x40xf32>
        tpu.vector_store %arg15[%c0_29, %c0_30], %33 {strides = array<i32>} : memref<1x40xf32, #tpu.memory_space<vmem>>, vector<1x40xf32>,
      } else {
      }
      %c0_7 = arith.constant 0 : index
      %c0_8 = arith.constant 0 : index
      %13 = vector.load %arg3[%c0_7, %c0_8] : memref<4x40xf32, #tpu.memory_space<vmem>>, vector<4x40xf32>
      %cst_9 = arith.constant dense<0.000000e+00> : vector<16x40xf32>
      %14 = tpu.matmul %0, %13, %cst_9 {dimension_numbers = #tpu.dot_dimension_numbers<[1], [0], [0], [1], [0, 0, 1, 1], [], []>} : vector<16x4xf32>, vector<4x40xf32>, vector<16x40xf32> -> vector<16x40xf32>
      %c0_10 = arith.constant 0 : index
      %c0_11 = arith.constant 0 : index
      %15 = vector.load %arg4[%c0_10, %c0_11] : memref<1x40xf32, #tpu.memory_space<vmem>>, vector<1x40xf32>
      %16 = vector.broadcast %15 : vector<1x40xf32> to vector<16x40xf32>
      %17 = arith.addf %14, %16 : vector<16x40xf32>
      %c0_12 = arith.constant 0 : index
      %c0_13 = arith.constant 0 : index
      %18 = vector.load %arg14[%c0_12, %c0_13] : memref<1x40xf32, #tpu.memory_space<vmem>>, vector<1x40xf32>
      %cst_14 = arith.constant dense<0.000000e+00> : vector<40xf32>
      %19 = vector.multi_reduction <add>, %17, %cst_14 [0] : vector<16x40xf32> to vector<40xf32>
      %20 = vector.shape_cast %19 : vector<40xf32> to vector<1x40xf32>
      %21 = arith.addf %18, %20 : vector<1x40xf32>
      %c0_15 = arith.constant 0 : index
      %c0_16 = arith.constant 0 : index
      %22 = vector.load %arg14[%c0_15, %c0_16] : memref<1x40xf32, #tpu.memory_space<vmem>>, vector<1x40xf32>
      tpu.vector_store %arg14[%c0_15, %c0_16], %21 {strides = array<i32>} : memref<1x40xf32, #tpu.memory_space<vmem>>, vector<1x40xf32>,
      %c0_17 = arith.constant 0 : index
      %c0_18 = arith.constant 0 : index
      %23 = vector.load %arg15[%c0_17, %c0_18] : memref<1x40xf32, #tpu.memory_space<vmem>>, vector<1x40xf32>
      %24 = arith.mulf %17, %17 : vector<16x40xf32>
      %cst_19 = arith.constant dense<0.000000e+00> : vector<40xf32>
      %25 = vector.multi_reduction <add>, %24, %cst_19 [0] : vector<16x40xf32> to vector<40xf32>
      %26 = vector.shape_cast %25 : vector<40xf32> to vector<1x40xf32>
      %27 = arith.addf %23, %26 : vector<1x40xf32>
      %c0_20 = arith.constant 0 : index
      %c0_21 = arith.constant 0 : index
      %28 = vector.load %arg15[%c0_20, %c0_21] : memref<1x40xf32, #tpu.memory_space<vmem>>, vector<1x40xf32>
      tpu.vector_store %arg15[%c0_20, %c0_21], %27 {strides = array<i32>} : memref<1x40xf32, #tpu.memory_space<vmem>>, vector<1x40xf32>,
      %cst_22 = arith.constant 0.000000e+00 : f32
      %29 = vector.broadcast %cst_22 : f32 to vector<16x1xf32>
      %c0_23 = arith.constant 0 : index
      %c0_24 = arith.constant 0 : index
      %30 = vector.load %arg13[%c0_23, %c0_24] : memref<16x1xf32, #tpu.memory_space<vmem>>, vector<16x1xf32>
      tpu.vector_store %arg13[%c0_23, %c0_24], %29 {strides = array<i32>} : memref<16x1xf32, #tpu.memory_space<vmem>>, vector<16x1xf32>,
    } else {
    }
    %c1_i32 = arith.constant 1 : i32
    %4 = arith.cmpi eq, %arg0, %c1_i32 : i32
    %5 = arith.extui %4 : i1 to i32
    %cst = arith.constant 1.562500e-02 : f32
    %c0_i32_2 = arith.constant 0 : i32
    %6 = arith.cmpi ne, %5, %c0_i32_2 : i32
    scf.if %6 {
      %c0_i32_5 = arith.constant 0 : i32
      %10 = arith.cmpi eq, %arg1, %c0_i32_5 : i32
      %11 = arith.extui %10 : i1 to i32
      %c0_i32_6 = arith.constant 0 : i32
      %12 = arith.cmpi ne, %11, %c0_i32_6 : i32
      scf.if %12 {
        %c0_35 = arith.constant 0 : index
        %c0_36 = arith.constant 0 : index
        %44 = vector.load %arg14[%c0_35, %c0_36] : memref<1x40xf32, #tpu.memory_space<vmem>>, vector<1x40xf32>
        %45 = vector.broadcast %cst : f32 to vector<1x40xf32>
        %46 = arith.mulf %44, %45 : vector<1x40xf32>
        %c0_37 = arith.constant 0 : index
        %c0_38 = arith.constant 0 : index
        %47 = vector.load %arg15[%c0_37, %c0_38] : memref<1x40xf32, #tpu.memory_space<vmem>>, vector<1x40xf32>
        %48 = vector.broadcast %cst : f32 to vector<1x40xf32>
        %49 = arith.mulf %47, %48 : vector<1x40xf32>
        %50 = arith.mulf %46, %46 : vector<1x40xf32>
        %51 = arith.subf %49, %50 : vector<1x40xf32>
        %cst_39 = arith.constant 0.000000e+00 : f32
        %52 = vector.broadcast %cst_39 : f32 to vector<1x40xf32>
        %53 = arith.maximumf %51, %52 : vector<1x40xf32>
        %c0_40 = arith.constant 0 : index
        %c0_41 = arith.constant 0 : index
        %54 = vector.load %arg5[%c0_40, %c0_41] : memref<1x40xf32, #tpu.memory_space<vmem>>, vector<1x40xf32>
        %cst_42 = arith.constant 9.99999974E-6 : f32
        %55 = vector.broadcast %cst_42 : f32 to vector<1x40xf32>
        %56 = arith.addf %53, %55 : vector<1x40xf32>
        %57 = math.rsqrt %56 : vector<1x40xf32>
        %58 = arith.mulf %54, %57 : vector<1x40xf32>
        %c0_43 = arith.constant 0 : index
        %c0_44 = arith.constant 0 : index
        %59 = vector.load %arg14[%c0_43, %c0_44] : memref<1x40xf32, #tpu.memory_space<vmem>>, vector<1x40xf32>
        tpu.vector_store %arg14[%c0_43, %c0_44], %58 {strides = array<i32>} : memref<1x40xf32, #tpu.memory_space<vmem>>, vector<1x40xf32>,
        %c0_45 = arith.constant 0 : index
        %c0_46 = arith.constant 0 : index
        %60 = vector.load %arg6[%c0_45, %c0_46] : memref<1x40xf32, #tpu.memory_space<vmem>>, vector<1x40xf32>
        %61 = arith.mulf %46, %58 : vector<1x40xf32>
        %62 = arith.subf %60, %61 : vector<1x40xf32>
        %c0_47 = arith.constant 0 : index
        %c0_48 = arith.constant 0 : index
        %63 = vector.load %arg15[%c0_47, %c0_48] : memref<1x40xf32, #tpu.memory_space<vmem>>, vector<1x40xf32>
        tpu.vector_store %arg15[%c0_47, %c0_48], %62 {strides = array<i32>} : memref<1x40xf32, #tpu.memory_space<vmem>>, vector<1x40xf32>,
        %cst_49 = arith.constant 0.000000e+00 : f32
        %64 = vector.broadcast %cst_49 : f32 to vector<1x20xf32>
        %c0_50 = arith.constant 0 : index
        %c0_51 = arith.constant 0 : index
        %65 = vector.load %arg16[%c0_50, %c0_51] : memref<1x20xf32, #tpu.memory_space<vmem>>, vector<1x20xf32>
        tpu.vector_store %arg16[%c0_50, %c0_51], %64 {strides = array<i32>} : memref<1x20xf32, #tpu.memory_space<vmem>>, vector<1x20xf32>,
        %cst_52 = arith.constant 0.000000e+00 : f32
        %66 = vector.broadcast %cst_52 : f32 to vector<1x20xf32>
        %c0_53 = arith.constant 0 : index
        %c0_54 = arith.constant 0 : index
        %67 = vector.load %arg17[%c0_53, %c0_54] : memref<1x20xf32, #tpu.memory_space<vmem>>, vector<1x20xf32>
        tpu.vector_store %arg17[%c0_53, %c0_54], %66 {strides = array<i32>} : memref<1x20xf32, #tpu.memory_space<vmem>>, vector<1x20xf32>,
      } else {
      }
      %c0_7 = arith.constant 0 : index
      %c0_8 = arith.constant 0 : index
      %13 = vector.load %arg3[%c0_7, %c0_8] : memref<4x40xf32, #tpu.memory_space<vmem>>, vector<4x40xf32>
      %cst_9 = arith.constant dense<0.000000e+00> : vector<16x40xf32>
      %14 = tpu.matmul %0, %13, %cst_9 {dimension_numbers = #tpu.dot_dimension_numbers<[1], [0], [0], [1], [0, 0, 1, 1], [], []>} : vector<16x4xf32>, vector<4x40xf32>, vector<16x40xf32> -> vector<16x40xf32>
      %c0_10 = arith.constant 0 : index
      %c0_11 = arith.constant 0 : index
      %15 = vector.load %arg4[%c0_10, %c0_11] : memref<1x40xf32, #tpu.memory_space<vmem>>, vector<1x40xf32>
      %16 = vector.broadcast %15 : vector<1x40xf32> to vector<16x40xf32>
      %17 = arith.addf %14, %16 : vector<16x40xf32>
      %c0_12 = arith.constant 0 : index
      %c0_13 = arith.constant 0 : index
      %18 = vector.load %arg14[%c0_12, %c0_13] : memref<1x40xf32, #tpu.memory_space<vmem>>, vector<1x40xf32>
      %19 = vector.broadcast %18 : vector<1x40xf32> to vector<16x40xf32>
      %20 = arith.mulf %17, %19 : vector<16x40xf32>
      %c0_14 = arith.constant 0 : index
      %c0_15 = arith.constant 0 : index
      %21 = vector.load %arg15[%c0_14, %c0_15] : memref<1x40xf32, #tpu.memory_space<vmem>>, vector<1x40xf32>
      %22 = vector.broadcast %21 : vector<1x40xf32> to vector<16x40xf32>
      %23 = arith.addf %20, %22 : vector<16x40xf32>
      %cst_16 = arith.constant 0.000000e+00 : f32
      %24 = vector.broadcast %cst_16 : f32 to vector<16x40xf32>
      %25 = arith.maximumf %23, %24 : vector<16x40xf32>
      %c0_17 = arith.constant 0 : index
      %c0_18 = arith.constant 0 : index
      %26 = vector.load %arg7[%c0_17, %c0_18] : memref<40x20xf32, #tpu.memory_space<vmem>>, vector<40x20xf32>
      %cst_19 = arith.constant dense<0.000000e+00> : vector<16x20xf32>
      %27 = tpu.matmul %25, %26, %cst_19 {dimension_numbers = #tpu.dot_dimension_numbers<[1], [0], [0], [1], [0, 0, 1, 1], [], []>} : vector<16x40xf32>, vector<40x20xf32>, vector<16x20xf32> -> vector<16x20xf32>
      %c0_20 = arith.constant 0 : index
      %c0_21 = arith.constant 0 : index
      %28 = vector.load %arg8[%c0_20, %c0_21] : memref<1x20xf32, #tpu.memory_space<vmem>>, vector<1x20xf32>
      %29 = vector.broadcast %28 : vector<1x20xf32> to vector<16x20xf32>
      %30 = arith.addf %27, %29 : vector<16x20xf32>
      %c0_22 = arith.constant 0 : index
      %c0_23 = arith.constant 0 : index
      %31 = vector.load %arg16[%c0_22, %c0_23] : memref<1x20xf32, #tpu.memory_space<vmem>>, vector<1x20xf32>
      %cst_24 = arith.constant dense<0.000000e+00> : vector<20xf32>
      %32 = vector.multi_reduction <add>, %30, %cst_24 [0] : vector<16x20xf32> to vector<20xf32>
      %33 = vector.shape_cast %32 : vector<20xf32> to vector<1x20xf32>
      %34 = arith.addf %31, %33 : vector<1x20xf32>
      %c0_25 = arith.constant 0 : index
      %c0_26 = arith.constant 0 : index
      %35 = vector.load %arg16[%c0_25, %c0_26] : memref<1x20xf32, #tpu.memory_space<vmem>>, vector<1x20xf32>
      tpu.vector_store %arg16[%c0_25, %c0_26], %34 {strides = array<i32>} : memref<1x20xf32, #tpu.memory_space<vmem>>, vector<1x20xf32>,
      %c0_27 = arith.constant 0 : index
      %c0_28 = arith.constant 0 : index
      %36 = vector.load %arg17[%c0_27, %c0_28] : memref<1x20xf32, #tpu.memory_space<vmem>>, vector<1x20xf32>
      %37 = arith.mulf %30, %30 : vector<16x20xf32>
      %cst_29 = arith.constant dense<0.000000e+00> : vector<20xf32>
      %38 = vector.multi_reduction <add>, %37, %cst_29 [0] : vector<16x20xf32> to vector<20xf32>
      %39 = vector.shape_cast %38 : vector<20xf32> to vector<1x20xf32>
      %40 = arith.addf %36, %39 : vector<1x20xf32>
      %c0_30 = arith.constant 0 : index
      %c0_31 = arith.constant 0 : index
      %41 = vector.load %arg17[%c0_30, %c0_31] : memref<1x20xf32, #tpu.memory_space<vmem>>, vector<1x20xf32>
      tpu.vector_store %arg17[%c0_30, %c0_31], %40 {strides = array<i32>} : memref<1x20xf32, #tpu.memory_space<vmem>>, vector<1x20xf32>,
      %cst_32 = arith.constant 0.000000e+00 : f32
      %42 = vector.broadcast %cst_32 : f32 to vector<16x1xf32>
      %c0_33 = arith.constant 0 : index
      %c0_34 = arith.constant 0 : index
      %43 = vector.load %arg13[%c0_33, %c0_34] : memref<16x1xf32, #tpu.memory_space<vmem>>, vector<16x1xf32>
      tpu.vector_store %arg13[%c0_33, %c0_34], %42 {strides = array<i32>} : memref<16x1xf32, #tpu.memory_space<vmem>>, vector<16x1xf32>,
    } else {
    }
    %c2_i32 = arith.constant 2 : i32
    %7 = arith.cmpi eq, %arg0, %c2_i32 : i32
    %8 = arith.extui %7 : i1 to i32
    %cst_3 = arith.constant 1.562500e-02 : f32
    %c0_i32_4 = arith.constant 0 : i32
    %9 = arith.cmpi ne, %8, %c0_i32_4 : i32
    scf.if %9 {
      %c0_i32_5 = arith.constant 0 : i32
      %10 = arith.cmpi eq, %arg1, %c0_i32_5 : i32
      %11 = arith.extui %10 : i1 to i32
      %c0_i32_6 = arith.constant 0 : i32
      %12 = arith.cmpi ne, %11, %c0_i32_6 : i32
      scf.if %12 {
        %c0_34 = arith.constant 0 : index
        %c0_35 = arith.constant 0 : index
        %46 = vector.load %arg16[%c0_34, %c0_35] : memref<1x20xf32, #tpu.memory_space<vmem>>, vector<1x20xf32>
        %47 = vector.broadcast %cst_3 : f32 to vector<1x20xf32>
        %48 = arith.mulf %46, %47 : vector<1x20xf32>
        %c0_36 = arith.constant 0 : index
        %c0_37 = arith.constant 0 : index
        %49 = vector.load %arg17[%c0_36, %c0_37] : memref<1x20xf32, #tpu.memory_space<vmem>>, vector<1x20xf32>
        %50 = vector.broadcast %cst_3 : f32 to vector<1x20xf32>
        %51 = arith.mulf %49, %50 : vector<1x20xf32>
        %52 = arith.mulf %48, %48 : vector<1x20xf32>
        %53 = arith.subf %51, %52 : vector<1x20xf32>
        %cst_38 = arith.constant 0.000000e+00 : f32
        %54 = vector.broadcast %cst_38 : f32 to vector<1x20xf32>
        %55 = arith.maximumf %53, %54 : vector<1x20xf32>
        %c0_39 = arith.constant 0 : index
        %c0_40 = arith.constant 0 : index
        %56 = vector.load %arg9[%c0_39, %c0_40] : memref<1x20xf32, #tpu.memory_space<vmem>>, vector<1x20xf32>
        %cst_41 = arith.constant 9.99999974E-6 : f32
        %57 = vector.broadcast %cst_41 : f32 to vector<1x20xf32>
        %58 = arith.addf %55, %57 : vector<1x20xf32>
        %59 = math.rsqrt %58 : vector<1x20xf32>
        %60 = arith.mulf %56, %59 : vector<1x20xf32>
        %c0_42 = arith.constant 0 : index
        %c0_43 = arith.constant 0 : index
        %61 = vector.load %arg16[%c0_42, %c0_43] : memref<1x20xf32, #tpu.memory_space<vmem>>, vector<1x20xf32>
        tpu.vector_store %arg16[%c0_42, %c0_43], %60 {strides = array<i32>} : memref<1x20xf32, #tpu.memory_space<vmem>>, vector<1x20xf32>,
        %c0_44 = arith.constant 0 : index
        %c0_45 = arith.constant 0 : index
        %62 = vector.load %arg10[%c0_44, %c0_45] : memref<1x20xf32, #tpu.memory_space<vmem>>, vector<1x20xf32>
        %63 = arith.mulf %48, %60 : vector<1x20xf32>
        %64 = arith.subf %62, %63 : vector<1x20xf32>
        %c0_46 = arith.constant 0 : index
        %c0_47 = arith.constant 0 : index
        %65 = vector.load %arg17[%c0_46, %c0_47] : memref<1x20xf32, #tpu.memory_space<vmem>>, vector<1x20xf32>
        tpu.vector_store %arg17[%c0_46, %c0_47], %64 {strides = array<i32>} : memref<1x20xf32, #tpu.memory_space<vmem>>, vector<1x20xf32>,
      } else {
      }
      %c0_7 = arith.constant 0 : index
      %c0_8 = arith.constant 0 : index
      %13 = vector.load %arg3[%c0_7, %c0_8] : memref<4x40xf32, #tpu.memory_space<vmem>>, vector<4x40xf32>
      %cst_9 = arith.constant dense<0.000000e+00> : vector<16x40xf32>
      %14 = tpu.matmul %0, %13, %cst_9 {dimension_numbers = #tpu.dot_dimension_numbers<[1], [0], [0], [1], [0, 0, 1, 1], [], []>} : vector<16x4xf32>, vector<4x40xf32>, vector<16x40xf32> -> vector<16x40xf32>
      %c0_10 = arith.constant 0 : index
      %c0_11 = arith.constant 0 : index
      %15 = vector.load %arg4[%c0_10, %c0_11] : memref<1x40xf32, #tpu.memory_space<vmem>>, vector<1x40xf32>
      %16 = vector.broadcast %15 : vector<1x40xf32> to vector<16x40xf32>
      %17 = arith.addf %14, %16 : vector<16x40xf32>
      %c0_12 = arith.constant 0 : index
      %c0_13 = arith.constant 0 : index
      %18 = vector.load %arg14[%c0_12, %c0_13] : memref<1x40xf32, #tpu.memory_space<vmem>>, vector<1x40xf32>
      %19 = vector.broadcast %18 : vector<1x40xf32> to vector<16x40xf32>
      %20 = arith.mulf %17, %19 : vector<16x40xf32>
      %c0_14 = arith.constant 0 : index
      %c0_15 = arith.constant 0 : index
      %21 = vector.load %arg15[%c0_14, %c0_15] : memref<1x40xf32, #tpu.memory_space<vmem>>, vector<1x40xf32>
      %22 = vector.broadcast %21 : vector<1x40xf32> to vector<16x40xf32>
      %23 = arith.addf %20, %22 : vector<16x40xf32>
      %cst_16 = arith.constant 0.000000e+00 : f32
      %24 = vector.broadcast %cst_16 : f32 to vector<16x40xf32>
      %25 = arith.maximumf %23, %24 : vector<16x40xf32>
      %c0_17 = arith.constant 0 : index
      %c0_18 = arith.constant 0 : index
      %26 = vector.load %arg7[%c0_17, %c0_18] : memref<40x20xf32, #tpu.memory_space<vmem>>, vector<40x20xf32>
      %cst_19 = arith.constant dense<0.000000e+00> : vector<16x20xf32>
      %27 = tpu.matmul %25, %26, %cst_19 {dimension_numbers = #tpu.dot_dimension_numbers<[1], [0], [0], [1], [0, 0, 1, 1], [], []>} : vector<16x40xf32>, vector<40x20xf32>, vector<16x20xf32> -> vector<16x20xf32>
      %c0_20 = arith.constant 0 : index
      %c0_21 = arith.constant 0 : index
      %28 = vector.load %arg8[%c0_20, %c0_21] : memref<1x20xf32, #tpu.memory_space<vmem>>, vector<1x20xf32>
      %29 = vector.broadcast %28 : vector<1x20xf32> to vector<16x20xf32>
      %30 = arith.addf %27, %29 : vector<16x20xf32>
      %c0_22 = arith.constant 0 : index
      %c0_23 = arith.constant 0 : index
      %31 = vector.load %arg16[%c0_22, %c0_23] : memref<1x20xf32, #tpu.memory_space<vmem>>, vector<1x20xf32>
      %32 = vector.broadcast %31 : vector<1x20xf32> to vector<16x20xf32>
      %33 = arith.mulf %30, %32 : vector<16x20xf32>
      %c0_24 = arith.constant 0 : index
      %c0_25 = arith.constant 0 : index
      %34 = vector.load %arg17[%c0_24, %c0_25] : memref<1x20xf32, #tpu.memory_space<vmem>>, vector<1x20xf32>
      %35 = vector.broadcast %34 : vector<1x20xf32> to vector<16x20xf32>
      %36 = arith.addf %33, %35 : vector<16x20xf32>
      %cst_26 = arith.constant 0.000000e+00 : f32
      %37 = vector.broadcast %cst_26 : f32 to vector<16x20xf32>
      %38 = arith.maximumf %36, %37 : vector<16x20xf32>
      %c0_27 = arith.constant 0 : index
      %c0_28 = arith.constant 0 : index
      %39 = vector.load %arg11[%c0_27, %c0_28] : memref<20x1xf32, #tpu.memory_space<vmem>>, vector<20x1xf32>
      %cst_29 = arith.constant dense<0.000000e+00> : vector<16x1xf32>
      %40 = tpu.matmul %38, %39, %cst_29 {dimension_numbers = #tpu.dot_dimension_numbers<[1], [0], [0], [1], [0, 0, 1, 1], [], []>} : vector<16x20xf32>, vector<20x1xf32>, vector<16x1xf32> -> vector<16x1xf32>
      %c0_30 = arith.constant 0 : index
      %c0_31 = arith.constant 0 : index
      %41 = vector.load %arg12[%c0_30, %c0_31] : memref<1x1xf32, #tpu.memory_space<vmem>>, vector<1x1xf32>
      %42 = vector.broadcast %41 : vector<1x1xf32> to vector<16x1xf32>
      %43 = arith.addf %40, %42 : vector<16x1xf32>
      %44 = math.tanh %43 : vector<16x1xf32>
      %c0_32 = arith.constant 0 : index
      %c0_33 = arith.constant 0 : index
      %45 = vector.load %arg13[%c0_32, %c0_33] : memref<16x1xf32, #tpu.memory_space<vmem>>, vector<16x1xf32>
      tpu.vector_store %arg13[%c0_32, %c0_33], %44 {strides = array<i32>} : memref<16x1xf32, #tpu.memory_space<vmem>>, vector<16x1xf32>,
    } else {
    }
    return
  }
  func.func @transform_0(%arg0: i32, %arg1: i32) -> (i32, i32) {
    %c0_i32 = arith.constant 0 : i32
    %c0_i32_0 = arith.constant 0 : i32
    return %arg1, %c0_i32 : i32, i32
  }
  func.func @transform_1(%arg0: i32, %arg1: i32) -> (i32, i32) {
    %c0_i32 = arith.constant 0 : i32
    %c0_i32_0 = arith.constant 0 : i32
    %c0_i32_1 = arith.constant 0 : i32
    return %c0_i32, %c0_i32_0 : i32, i32
  }
  func.func @transform_2(%arg0: i32, %arg1: i32) -> (i32, i32) {
    %c0_i32 = arith.constant 0 : i32
    %c0_i32_0 = arith.constant 0 : i32
    %c0_i32_1 = arith.constant 0 : i32
    return %c0_i32, %c0_i32_0 : i32, i32
  }
  func.func @transform_3(%arg0: i32, %arg1: i32) -> (i32, i32) {
    %c0_i32 = arith.constant 0 : i32
    %c0_i32_0 = arith.constant 0 : i32
    %c0_i32_1 = arith.constant 0 : i32
    return %c0_i32, %c0_i32_0 : i32, i32
  }
  func.func @transform_4(%arg0: i32, %arg1: i32) -> (i32, i32) {
    %c0_i32 = arith.constant 0 : i32
    %c0_i32_0 = arith.constant 0 : i32
    %c0_i32_1 = arith.constant 0 : i32
    return %c0_i32, %c0_i32_0 : i32, i32
  }
  func.func @transform_5(%arg0: i32, %arg1: i32) -> (i32, i32) {
    %c0_i32 = arith.constant 0 : i32
    %c0_i32_0 = arith.constant 0 : i32
    %c0_i32_1 = arith.constant 0 : i32
    return %c0_i32, %c0_i32_0 : i32, i32
  }
  func.func @transform_6(%arg0: i32, %arg1: i32) -> (i32, i32) {
    %c0_i32 = arith.constant 0 : i32
    %c0_i32_0 = arith.constant 0 : i32
    %c0_i32_1 = arith.constant 0 : i32
    return %c0_i32, %c0_i32_0 : i32, i32
  }
  func.func @transform_7(%arg0: i32, %arg1: i32) -> (i32, i32) {
    %c0_i32 = arith.constant 0 : i32
    %c0_i32_0 = arith.constant 0 : i32
    %c0_i32_1 = arith.constant 0 : i32
    return %c0_i32, %c0_i32_0 : i32, i32
  }
  func.func @transform_8(%arg0: i32, %arg1: i32) -> (i32, i32) {
    %c0_i32 = arith.constant 0 : i32
    %c0_i32_0 = arith.constant 0 : i32
    %c0_i32_1 = arith.constant 0 : i32
    return %c0_i32, %c0_i32_0 : i32, i32
  }
  func.func @transform_9(%arg0: i32, %arg1: i32) -> (i32, i32) {
    %c0_i32 = arith.constant 0 : i32
    %c0_i32_0 = arith.constant 0 : i32
    %c0_i32_1 = arith.constant 0 : i32
    return %c0_i32, %c0_i32_0 : i32, i32
  }
  func.func @transform_10(%arg0: i32, %arg1: i32) -> (i32, i32) {
    %c0_i32 = arith.constant 0 : i32
    %c0_i32_0 = arith.constant 0 : i32
    %c0_i32_1 = arith.constant 0 : i32
    return %c0_i32, %c0_i32_0 : i32, i32
  }
  func.func @transform_11(%arg0: i32, %arg1: i32) -> (i32, i32) {
    %c0_i32 = arith.constant 0 : i32
    %c0_i32_0 = arith.constant 0 : i32
    return %arg1, %c0_i32 : i32, i32
  }
}

</mosaic_0001>

<llo_original>
// kernel: tpu_custom_call.1
$region0: #{tpu_custom_call.1}
  #allocation0 [shape = 'u32[]', space=smem, size = 0x4, offset = 0x4, fixed_abs, tag = 'smem constant byte address 0x4 - core index']
  #allocation1 [shape = 'u32[144,128]{1,0:T(1,128)}', space=vmem, size = 0x12000, scoped, tag = 'internal scratch']
  #allocation2 [shape = 'f32[1,40]{1,0:T(1,128)}', space=vmem, size = 0x200, scoped, tag = 'scratch operand']
  #allocation3 [shape = 'f32[1,40]{1,0:T(1,128)}', space=vmem, size = 0x200, scoped, tag = 'scratch operand']
  #allocation4 [shape = 'f32[1,20]{1,0:T(1,128)}', space=vmem, size = 0x200, scoped, tag = 'scratch operand']
  #allocation5 [shape = 'f32[1,20]{1,0:T(1,128)}', space=vmem, size = 0x200, scoped, tag = 'scratch operand']
  #allocation6 [shape = 'f32[1,1]{1,0:T(1,128)S(1)}', space=vmem, size = 0x200, scoped, tag = 'scoped memory for tpu_custom_call.1']
  %s0 = inlined_call_operand.vmem [shape: f32[64,4], index: 0, kind: input, shape index: {}]
  %s1 = inlined_call_operand.vmem [shape: f32[4,40], index: 1, kind: input, shape index: {}]
  %s2 = inlined_call_operand.vmem [shape: f32[1,40], index: 2, kind: input, shape index: {}]
  %s3 = inlined_call_operand.vmem [shape: f32[1,40], index: 3, kind: input, shape index: {}]
  %s4 = inlined_call_operand.vmem [shape: f32[1,40], index: 4, kind: input, shape index: {}]
  %s5 = inlined_call_operand.vmem [shape: f32[40,20], index: 5, kind: input, shape index: {}]
  %s6 = inlined_call_operand.vmem [shape: f32[1,20], index: 6, kind: input, shape index: {}]
  %s7 = inlined_call_operand.vmem [shape: f32[1,20], index: 7, kind: input, shape index: {}]
  %s8 = inlined_call_operand.vmem [shape: f32[1,20], index: 8, kind: input, shape index: {}]
  %s9 = inlined_call_operand.vmem [shape: f32[20,1], index: 9, kind: input, shape index: {}]
  %s10 = inlined_call_operand.<no memory space> [shape: f32[1,1], index: 10, kind: input, shape index: {}]
  %s11 = inlined_call_operand.vmem [shape: f32[64,1], index: 11, kind: output, shape index: {}]
  %s12 = sld [smem:[#allocation0]]
  $region101: #{tpu_custom_call.1} parent=0
    _
  %s14 = ssub.s32 1, %s12
  %s15 = scalar_select 0, %s14, %s12
  %v16 = vstv %s10
  %17 = vst [vmem:[#allocation6] sm:$0x1] %v16
  loop: start=0, step=1, limit=14
  $region2: #{tpu_custom_call.1} parent=0 // loop_pre_header
    _
  $region3: #{tpu_custom_call.1} parent=0 // loop_header
    %s19 = sphi 0, %s23
    %p20 = scmp.ge.s32.totalorder %s19, 14
    %s26 = sphi 0, %s38
    %s27 = sphi 0, %s34
    %s28 = sphi 0, %s26
    %s29 = sphi 0, %s27
    %s30 = sphi 0, %s28
    %s31 = sphi 0, %s29
    %s41 = sphi 0, %s43
    %s44 = sphi 0, %s41
    %s45 = sphi 0, %s44
    %s61 = sphi 0, %s45
    %s65 = sphi 0, %s65
    %s67 = sphi 0, %s65
    %s68 = sphi 0, %s67
    %s82 = sphi 0, %s68
    %s86 = sphi 0, %s86
    %s88 = sphi 0, %s86
    %s89 = sphi 0, %s88
    %s103 = sphi 0, %s89
    %s107 = sphi 0, %s107
    %s109 = sphi 0, %s107
    %s110 = sphi 0, %s109
    %s124 = sphi 0, %s110
    %s128 = sphi 0, %s128
    %s130 = sphi 0, %s128
    %s131 = sphi 0, %s130
    %s145 = sphi 0, %s131
    %s149 = sphi 0, %s149
    %s151 = sphi 0, %s149
    %s152 = sphi 0, %s151
    %s166 = sphi 0, %s152
    %s170 = sphi 0, %s170
    %s172 = sphi 0, %s170
    %s173 = sphi 0, %s172
    %s187 = sphi 0, %s173
    %s191 = sphi 0, %s191
    %s193 = sphi 0, %s191
    %s194 = sphi 0, %s193
    %s208 = sphi 0, %s194
    %s212 = sphi 0, %s212
    %s214 = sphi 0, %s212
    %s215 = sphi 0, %s214
    %s229 = sphi 0, %s215
    %s233 = sphi 0, %s233
    %s235 = sphi 0, %s233
    %s236 = sphi 0, %s235
    %s250 = sphi 0, %s236
    %s254 = sphi 0, %s254
    %s256 = sphi 0, %s254
    %s257 = sphi 0, %s256
    %s271 = sphi 0, %s257
    %s277 = sphi 0, %s279
    %s280 = sphi 0, %s277
    %s281 = sphi 0, %s280
    %s297 = sphi 0, %s281
  $region4: #{tpu_custom_call.1} parent=0 // loop_header_branch
    %22 = sbr.rel (%p20) target = $region8
  $region5: #{tpu_custom_call.1} parent=0 // loop_body
    %s24 = ssub.s32 %s19, 1
    %s25 = ssub.s32 %s19, 2
    %s32 = sadd.s32 1, %s27
    %p33 = scmp.ge.s32.totalorder %s32, 4
    %s34 = scalar_select %p33, 0, %s32
    %s35 = sadd.s32 1, %s26
    %s36 = scalar_select %p33, %s35, %s26
    %p37 = scmp.ge.s32.totalorder %s36, 3
    %s38 = scalar_select %p37, 0, %s36
    %s39 = ssub.s32 %s27, %s34
    %p40 = scmp.eq.s32.totalorder %s39, 0
    %s42 = sadd.s32 %s41, 1
    %s43 = scalar_select %p40, %s41, %s42
    %p46 = pneg %p40
    %p47 = scmp.eq.s32.totalorder %s19, 11
    %p48 = por %p46, %p47
    %p49 = scmp.ne.s32.totalorder %s41, %s44
    %p50 = scmp.eq.s32.totalorder %s19, 0
    %p51 = por %p49, %p50
    %p52 = scmp.ne.s32.totalorder %s41, %s44
    %p53 = scmp.eq.s32.totalorder %s24, 11
    %p54 = por %p52, %p53
    %p55 = scmp.ne.s32.totalorder %s44, %s45
    %p56 = scmp.eq.s32.totalorder %s24, 0
    %p57 = por %p55, %p56
    %p58 = scmp.ne.s32.totalorder %s44, %s45
    %p59 = scmp.eq.s32.totalorder %s25, 11
    %p60 = por %p58, %p59
    %p62 = scmp.ne.s32.totalorder %s45, %s61
    %p63 = scmp.eq.s32.totalorder %s25, 0
    %p64 = por %p62, %p63
    %s66 = sadd.s32 %s65, 1
    %p69 = scmp.eq.s32.totalorder %s19, 11
    %p70 = scmp.ne.s32.totalorder %s65, %s67
    %p71 = scmp.eq.s32.totalorder %s19, 0
    %p72 = por %p70, %p71
    %p73 = scmp.ne.s32.totalorder %s65, %s67
    %p74 = scmp.eq.s32.totalorder %s24, 11
    %p75 = por %p73, %p74
    %p76 = scmp.ne.s32.totalorder %s67, %s68
    %p77 = scmp.eq.s32.totalorder %s24, 0
    %p78 = por %p76, %p77
    %p79 = scmp.ne.s32.totalorder %s67, %s68
    %p80 = scmp.eq.s32.totalorder %s25, 11
    %p81 = por %p79, %p80
    %p83 = scmp.ne.s32.totalorder %s68, %s82
    %p84 = scmp.eq.s32.totalorder %s25, 0
    %p85 = por %p83, %p84
    %s87 = sadd.s32 %s86, 1
    %p90 = scmp.eq.s32.totalorder %s19, 11
    %p91 = scmp.ne.s32.totalorder %s86, %s88
    %p92 = scmp.eq.s32.totalorder %s19, 0
    %p93 = por %p91, %p92
    %p94 = scmp.ne.s32.totalorder %s86, %s88
    %p95 = scmp.eq.s32.totalorder %s24, 11
    %p96 = por %p94, %p95
    %p97 = scmp.ne.s32.totalorder %s88, %s89
    %p98 = scmp.eq.s32.totalorder %s24, 0
    %p99 = por %p97, %p98
    %p100 = scmp.ne.s32.totalorder %s88, %s89
    %p101 = scmp.eq.s32.totalorder %s25, 11
    %p102 = por %p100, %p101
    %p104 = scmp.ne.s32.totalorder %s89, %s103
    %p105 = scmp.eq.s32.totalorder %s25, 0
    %p106 = por %p104, %p105
    %s108 = sadd.s32 %s107, 1
    %p111 = scmp.eq.s32.totalorder %s19, 11
    %p112 = scmp.ne.s32.totalorder %s107, %s109
    %p113 = scmp.eq.s32.totalorder %s19, 0
    %p114 = por %p112, %p113
    %p115 = scmp.ne.s32.totalorder %s107, %s109
    %p116 = scmp.eq.s32.totalorder %s24, 11
    %p117 = por %p115, %p116
    %p118 = scmp.ne.s32.totalorder %s109, %s110
    %p119 = scmp.eq.s32.totalorder %s24, 0
    %p120 = por %p118, %p119
    %p121 = scmp.ne.s32.totalorder %s109, %s110
    %p122 = scmp.eq.s32.totalorder %s25, 11
    %p123 = por %p121, %p122
    %p125 = scmp.ne.s32.totalorder %s110, %s124
    %p126 = scmp.eq.s32.totalorder %s25, 0
    %p127 = por %p125, %p126
    %s129 = sadd.s32 %s128, 1
    %p132 = scmp.eq.s32.totalorder %s19, 11
    %p133 = scmp.ne.s32.totalorder %s128, %s130
    %p134 = scmp.eq.s32.totalorder %s19, 0
    %p135 = por %p133, %p134
    %p136 = scmp.ne.s32.totalorder %s128, %s130
    %p137 = scmp.eq.s32.totalorder %s24, 11
    %p138 = por %p136, %p137
    %p139 = scmp.ne.s32.totalorder %s130, %s131
    %p140 = scmp.eq.s32.totalorder %s24, 0
    %p141 = por %p139, %p140
    %p142 = scmp.ne.s32.totalorder %s130, %s131
    %p143 = scmp.eq.s32.totalorder %s25, 11
    %p144 = por %p142, %p143
    %p146 = scmp.ne.s32.totalorder %s131, %s145
    %p147 = scmp.eq.s32.totalorder %s25, 0
    %p148 = por %p146, %p147
    %s150 = sadd.s32 %s149, 1
    %p153 = scmp.eq.s32.totalorder %s19, 11
    %p154 = scmp.ne.s32.totalorder %s149, %s151
    %p155 = scmp.eq.s32.totalorder %s19, 0
    %p156 = por %p154, %p155
    %p157 = scmp.ne.s32.totalorder %s149, %s151
    %p158 = scmp.eq.s32.totalorder %s24, 11
    %p159 = por %p157, %p158
    %p160 = scmp.ne.s32.totalorder %s151, %s152
    %p161 = scmp.eq.s32.totalorder %s24, 0
    %p162 = por %p160, %p161
    %p163 = scmp.ne.s32.totalorder %s151, %s152
    %p164 = scmp.eq.s32.totalorder %s25, 11
    %p165 = por %p163, %p164
    %p167 = scmp.ne.s32.totalorder %s152, %s166
    %p168 = scmp.eq.s32.totalorder %s25, 0
    %p169 = por %p167, %p168
    %s171 = sadd.s32 %s170, 1
    %p174 = scmp.eq.s32.totalorder %s19, 11
    %p175 = scmp.ne.s32.totalorder %s170, %s172
    %p176 = scmp.eq.s32.totalorder %s19, 0
    %p177 = por %p175, %p176
    %p178 = scmp.ne.s32.totalorder %s170, %s172
    %p179 = scmp.eq.s32.totalorder %s24, 11
    %p180 = por %p178, %p179
    %p181 = scmp.ne.s32.totalorder %s172, %s173
    %p182 = scmp.eq.s32.totalorder %s24, 0
    %p183 = por %p181, %p182
    %p184 = scmp.ne.s32.totalorder %s172, %s173
    %p185 = scmp.eq.s32.totalorder %s25, 11
    %p186 = por %p184, %p185
    %p188 = scmp.ne.s32.totalorder %s173, %s187
    %p189 = scmp.eq.s32.totalorder %s25, 0
    %p190 = por %p188, %p189
    %s192 = sadd.s32 %s191, 1
    %p195 = scmp.eq.s32.totalorder %s19, 11
    %p196 = scmp.ne.s32.totalorder %s191, %s193
    %p197 = scmp.eq.s32.totalorder %s19, 0
    %p198 = por %p196, %p197
    %p199 = scmp.ne.s32.totalorder %s191, %s193
    %p200 = scmp.eq.s32.totalorder %s24, 11
    %p201 = por %p199, %p200
    %p202 = scmp.ne.s32.totalorder %s193, %s194
    %p203 = scmp.eq.s32.totalorder %s24, 0
    %p204 = por %p202, %p203
    %p205 = scmp.ne.s32.totalorder %s193, %s194
    %p206 = scmp.eq.s32.totalorder %s25, 11
    %p207 = por %p205, %p206
    %p209 = scmp.ne.s32.totalorder %s194, %s208
    %p210 = scmp.eq.s32.totalorder %s25, 0
    %p211 = por %p209, %p210
    %s213 = sadd.s32 %s212, 1
    %p216 = scmp.eq.s32.totalorder %s19, 11
    %p217 = scmp.ne.s32.totalorder %s212, %s214
    %p218 = scmp.eq.s32.totalorder %s19, 0
    %p219 = por %p217, %p218
    %p220 = scmp.ne.s32.totalorder %s212, %s214
    %p221 = scmp.eq.s32.totalorder %s24, 11
    %p222 = por %p220, %p221
    %p223 = scmp.ne.s32.totalorder %s214, %s215
    %p224 = scmp.eq.s32.totalorder %s24, 0
    %p225 = por %p223, %p224
    %p226 = scmp.ne.s32.totalorder %s214, %s215
    %p227 = scmp.eq.s32.totalorder %s25, 11
    %p228 = por %p226, %p227
    %p230 = scmp.ne.s32.totalorder %s215, %s229
    %p231 = scmp.eq.s32.totalorder %s25, 0
    %p232 = por %p230, %p231
    %s234 = sadd.s32 %s233, 1
    %p237 = scmp.eq.s32.totalorder %s19, 11
    %p238 = scmp.ne.s32.totalorder %s233, %s235
    %p239 = scmp.eq.s32.totalorder %s19, 0
    %p240 = por %p238, %p239
    %p241 = scmp.ne.s32.totalorder %s233, %s235
    %p242 = scmp.eq.s32.totalorder %s24, 11
    %p243 = por %p241, %p242
    %p244 = scmp.ne.s32.totalorder %s235, %s236
    %p245 = scmp.eq.s32.totalorder %s24, 0
    %p246 = por %p244, %p245
    %p247 = scmp.ne.s32.totalorder %s235, %s236
    %p248 = scmp.eq.s32.totalorder %s25, 11
    %p249 = por %p247, %p248
    %p251 = scmp.ne.s32.totalorder %s236, %s250
    %p252 = scmp.eq.s32.totalorder %s25, 0
    %p253 = por %p251, %p252
    %s255 = sadd.s32 %s254, 1
    %p258 = scmp.eq.s32.totalorder %s19, 11
    %p259 = scmp.ne.s32.totalorder %s254, %s256
    %p260 = scmp.eq.s32.totalorder %s19, 0
    %p261 = por %p259, %p260
    %p262 = scmp.ne.s32.totalorder %s254, %s256
    %p263 = scmp.eq.s32.totalorder %s24, 11
    %p264 = por %p262, %p263
    %p265 = scmp.ne.s32.totalorder %s256, %s257
    %p266 = scmp.eq.s32.totalorder %s24, 0
    %p267 = por %p265, %p266
    %p268 = scmp.ne.s32.totalorder %s256, %s257
    %p269 = scmp.eq.s32.totalorder %s25, 11
    %p270 = por %p268, %p269
    %p272 = scmp.ne.s32.totalorder %s257, %s271
    %p273 = scmp.eq.s32.totalorder %s25, 0
    %p274 = por %p272, %p273
    %s275 = ssub.s32 %s27, %s34
    %p276 = scmp.eq.s32.totalorder %s275, 0
    %s278 = sadd.s32 %s277, 1
    %s279 = scalar_select %p276, %s277, %s278
    %p282 = pneg %p276
    %p283 = scmp.eq.s32.totalorder %s19, 11
    %p284 = por %p282, %p283
    %p285 = scmp.ne.s32.totalorder %s277, %s280
    %p286 = scmp.eq.s32.totalorder %s19, 0
    %p287 = por %p285, %p286
    %p288 = scmp.ne.s32.totalorder %s277, %s280
    %p289 = scmp.eq.s32.totalorder %s24, 11
    %p290 = por %p288, %p289
    %p291 = scmp.ne.s32.totalorder %s280, %s281
    %p292 = scmp.eq.s32.totalorder %s24, 0
    %p293 = por %p291, %p292
    %p294 = scmp.ne.s32.totalorder %s280, %s281
    %p295 = scmp.eq.s32.totalorder %s25, 11
    %p296 = por %p294, %p295
    %p298 = scmp.ne.s32.totalorder %s281, %s297
    %p299 = scmp.eq.s32.totalorder %s25, 0
    %p300 = por %p298, %p299
    %p301 = scmp.le.s32.totalorder 1, %s19
    %p302 = scmp.lt.s32.totalorder %s19, 13
    %p303 = pnand %p301, %p302
    %p304 = pneg %p303
    // Predicated region
    $region9: #{tpu_custom_call.1} parent=5 // pred_check
      _
    $region10: #{tpu_custom_call.1} parent=5 // pred_check_branch
      %306 = sbr.rel (%p303) target = $region12
    $region11: #{tpu_custom_call.1} parent=5 // pred_region
      %s307 = ssub.s32 %s19, 1
      // Predicated region
      $region13: #{tpu_custom_call.1} parent=11 // pred_check
        %p308 = pneg %p78
      $region14: #{tpu_custom_call.1} parent=11 // pred_check_branch
        %310 = sbr.rel (%p308) target = $region16
      $region15: #{tpu_custom_call.1} parent=11 // pred_region
        _
      $region16: #{tpu_custom_call.1} parent=11 // pred_fallthru
        _
      // Predicated region
      $region17: #{tpu_custom_call.1} parent=11 // pred_check
        %p311 = pneg %p99
      $region18: #{tpu_custom_call.1} parent=11 // pred_check_branch
        %313 = sbr.rel (%p311) target = $region20
      $region19: #{tpu_custom_call.1} parent=11 // pred_region
        _
      $region20: #{tpu_custom_call.1} parent=11 // pred_fallthru
        _
      // Predicated region
      $region21: #{tpu_custom_call.1} parent=11 // pred_check
        %p314 = pneg %p120
      $region22: #{tpu_custom_call.1} parent=11 // pred_check_branch
        %316 = sbr.rel (%p314) target = $region24
      $region23: #{tpu_custom_call.1} parent=11 // pred_region
        _
      $region24: #{tpu_custom_call.1} parent=11 // pred_fallthru
        _
      // Predicated region
      $region25: #{tpu_custom_call.1} parent=11 // pred_check
        %p317 = pneg %p141
      $region26: #{tpu_custom_call.1} parent=11 // pred_check_branch
        %319 = sbr.rel (%p317) target = $region28
      $region27: #{tpu_custom_call.1} parent=11 // pred_region
        _
      $region28: #{tpu_custom_call.1} parent=11 // pred_fallthru
        _
      // Predicated region
      $region29: #{tpu_custom_call.1} parent=11 // pred_check
        %p320 = pneg %p162
      $region30: #{tpu_custom_call.1} parent=11 // pred_check_branch
        %322 = sbr.rel (%p320) target = $region32
      $region31: #{tpu_custom_call.1} parent=11 // pred_region
        _
      $region32: #{tpu_custom_call.1} parent=11 // pred_fallthru
        _
      // Predicated region
      $region33: #{tpu_custom_call.1} parent=11 // pred_check
        %p323 = pneg %p183
      $region34: #{tpu_custom_call.1} parent=11 // pred_check_branch
        %325 = sbr.rel (%p323) target = $region36
      $region35: #{tpu_custom_call.1} parent=11 // pred_region
        _
      $region36: #{tpu_custom_call.1} parent=11 // pred_fallthru
        _
      // Predicated region
      $region37: #{tpu_custom_call.1} parent=11 // pred_check
        %p326 = pneg %p204
      $region38: #{tpu_custom_call.1} parent=11 // pred_check_branch
        %328 = sbr.rel (%p326) target = $region40
      $region39: #{tpu_custom_call.1} parent=11 // pred_region
        _
      $region40: #{tpu_custom_call.1} parent=11 // pred_fallthru
        _
      // Predicated region
      $region41: #{tpu_custom_call.1} parent=11 // pred_check
        %p329 = pneg %p225
      $region42: #{tpu_custom_call.1} parent=11 // pred_check_branch
        %331 = sbr.rel (%p329) target = $region44
      $region43: #{tpu_custom_call.1} parent=11 // pred_region
        _
      $region44: #{tpu_custom_call.1} parent=11 // pred_fallthru
        _
      // Predicated region
      $region45: #{tpu_custom_call.1} parent=11 // pred_check
        %p332 = pneg %p246
      $region46: #{tpu_custom_call.1} parent=11 // pred_check_branch
        %334 = sbr.rel (%p332) target = $region48
      $region47: #{tpu_custom_call.1} parent=11 // pred_region
        _
      $region48: #{tpu_custom_call.1} parent=11 // pred_fallthru
        _
      // Predicated region
      $region49: #{tpu_custom_call.1} parent=11 // pred_check
        %p335 = pneg %p267
      $region50: #{tpu_custom_call.1} parent=11 // pred_check_branch
        %337 = sbr.rel (%p335) target = $region52
      $region51: #{tpu_custom_call.1} parent=11 // pred_region
        _
      $region52: #{tpu_custom_call.1} parent=11 // pred_fallthru
        _
    $region12: #{tpu_custom_call.1} parent=5 // pred_fallthru
      _
    %p338 = scmp.lt.s32.totalorder %s19, 12
    // Predicated region
    $region53: #{tpu_custom_call.1} parent=5 // pred_check
      %p339 = pneg %p338
    $region54: #{tpu_custom_call.1} parent=5 // pred_check_branch
      %341 = sbr.rel (%p339) target = $region56
    $region55: #{tpu_custom_call.1} parent=5 // pred_region
      // Predicated region
      $region57: #{tpu_custom_call.1} parent=55 // pred_check
        %p342 = pneg %p51
      $region58: #{tpu_custom_call.1} parent=55 // pred_check_branch
        %344 = sbr.rel (%p342) target = $region60
      $region59: #{tpu_custom_call.1} parent=55 // pred_region
        %s345 = smul.u32 2, %s27
        %p346 = scmp.lt.s32.totalorder %s345, 7
        %s347 = scalar_select %p346, %s345, 7
        %s348 = smul.addr %s347, 8
        %s349 = scalar_lea.vmem %s0, %s348
        %s350 = smul.u32 2, %s27
      $region60: #{tpu_custom_call.1} parent=55 // pred_fallthru
        _
    $region56: #{tpu_custom_call.1} parent=5 // pred_fallthru
      _
    %p351 = scmp.le.s32.totalorder 1, %s19
    %p352 = scmp.lt.s32.totalorder %s19, 13
    %p353 = pnand %p351, %p352
    %p354 = pneg %p353
    // Predicated region
    $region61: #{tpu_custom_call.1} parent=5 // pred_check
      _
    $region62: #{tpu_custom_call.1} parent=5 // pred_check_branch
      %356 = sbr.rel (%p353) target = $region64
    $region63: #{tpu_custom_call.1} parent=5 // pred_region
      %s357 = ssub.s32 %s19, 1
      %s358 = smul.u32 2, %s29
      %p359 = scmp.lt.s32.totalorder %s358, 7
      %s360 = scalar_select %p359, %s358, 7
      %s361 = smul.addr %s360, 8
      %s362 = scalar_lea.vmem %s0, %s361
      %p363 = pneg %p57
      %p364 = pneg %p54
      %p365 = pneg %p78
      %p366 = pneg %p75
      %p367 = pneg %p99
      %p368 = pneg %p96
      %p369 = pneg %p120
      %p370 = pneg %p117
      %p371 = pneg %p141
      %p372 = pneg %p138
      %p373 = pneg %p162
      %p374 = pneg %p159
      %p375 = pneg %p183
      %p376 = pneg %p180
      %p377 = pneg %p204
      %p378 = pneg %p201
      %p379 = pneg %p225
      %p380 = pneg %p222
      %p381 = pneg %p246
      %p382 = pneg %p243
      %p383 = pneg %p267
      %p384 = pneg %p264
      %p385 = pneg %p293
      %p386 = pneg %p290
      %s387 = smul.u32 2, %s29
      %p388 = scmp.lt.s32.totalorder %s387, 7
      %s389 = scalar_select %p388, %s387, 7
      %s390 = smul.addr %s389, 8
      %s391 = scalar_lea.vmem %s11, %s390
      %s392 = smul.u32 2, %s29
      %p393 = scmp.lt.s32.totalorder %s392, 7
      %s394 = scalar_select %p393, %s392, 7
      %s395 = smul.addr %s394, 8
      %s396 = scalar_lea.vmem %s0, %s395
      %s397 = smul.u32 2, %s29
      %s398 = smul.u32 2, %s29
      %p399 = scmp.lt.s32.totalorder %s398, 7
      %s400 = scalar_select %p399, %s398, 7
      %s401 = smul.addr %s400, 8
      %s402 = scalar_lea.vmem %s11, %s401
      %s403 = smul.u32 2, %s29
      %v404 = vld [vmem:[%s396] sm:$0xff]
      %v405 = vld [vmem:[%s396 + $0x8] sm:$0xff]
      %p406 = scmp.eq.s32.totalorder %s28, 0
      // Predicated region
      $region65: #{tpu_custom_call.1} parent=63 // pred_check
        %p407 = pneg %p406
      $region66: #{tpu_custom_call.1} parent=63 // pred_check_branch
        %409 = sbr.rel (%p407) target = $region68
      $region67: #{tpu_custom_call.1} parent=63 // pred_region
        %p410 = scmp.eq.s32.totalorder %s29, 0
        // Predicated region
        $region69: #{tpu_custom_call.1} parent=67 // pred_check
          %p411 = pneg %p410
        $region70: #{tpu_custom_call.1} parent=67 // pred_check_branch
          %413 = sbr.rel (%p411) target = $region72
        $region71: #{tpu_custom_call.1} parent=67 // pred_region
          %vm414 = vcmask 319488
          %415 = vst.msk [vmem:[#allocation2] sm:$0x1] %vm414, 0.0
          %416 = vst.msk [vmem:[#allocation3] sm:$0x1] %vm414, 0.0
        $region72: #{tpu_custom_call.1} parent=67 // pred_fallthru
          _
        %v417 = vld [vmem:[%s1] sm:$0xf]
        %v418 = vld [vmem:[%s2] sm:$0x1]
        %v420 = vlaneseq
        %v421 = vshrl.u32 %v420, 7
        %v422 = vsub.s32 0, %v421
        %v423 = vrot.slane %v418, %v422
        %vm425 = vcmask 31744
        %v427 = vsel %vm425, %v404, 0
        %v430 = vsel %vm425, %v405, 0
        %vm432 = vcmask 1043456
        %v434 = vsel %vm432, %v417, 0
        %436 = vmatprep.subr.mxu0 0.0
        %437 = vmatpush1.msra.mxu0 %v434
        %438 = vmatprep.subr.mxu0 0.0
        %439 = vmatpush1.msra.mxu0 0.0
        %440 = vmatprep.subr.mxu0 0.0
        %441 = vmatpush1.msra.mxu0 0.0
        %442 = vmatprep.subr.mxu0 0.0
        %443 = vmatpush1.msra.mxu0 0.0
        %444 = vmatprep.subr.mxu0 0.0
        %445 = vmatpush1.msra.mxu0 0.0
        %446 = vmatprep.subr.mxu0 0.0
        %447 = vmatpush1.msra.mxu0 0.0
        %448 = vmatprep.subr.mxu0 0.0
        %449 = vmatpush1.msra.mxu0 0.0
        %450 = vmatprep.subr.mxu0 0.0
        %451 = vmatpush1.msra.mxu0 0.0
        %452 = vmatprep.subr.mxu0 0.0
        %453 = vmatpush1.msra.mxu0 0.0
        %454 = vmatprep.subr.mxu0 0.0
        %455 = vmatpush1.msra.mxu0 0.0
        %456 = vmatprep.subr.mxu0 0.0
        %457 = vmatpush1.msra.mxu0 0.0
        %458 = vmatprep.subr.mxu0 0.0
        %459 = vmatpush1.msra.mxu0 0.0
        %460 = vmatprep.subr.mxu0 0.0
        %461 = vmatpush1.msra.mxu0 0.0
        %462 = vmatprep.subr.mxu0 0.0
        %463 = vmatpush1.msra.mxu0 0.0
        %464 = vmatprep.subr.mxu0 0.0
        %465 = vmatpush1.msra.mxu0 0.0
        %466 = vmatprep.subr.mxu0 0.0
        %467 = vmatpush1.msra.mxu0 0.0
        %468 = vmatprep.subr.mxu0 0.0
        %469 = vmatpush1.msra.mxu0 0.0
        %470 = vmatprep.subr.mxu0 0.0
        %471 = vmatpush1.msra.mxu0 0.0
        %472 = vmatprep.subr.mxu0 0.0
        %473 = vmatpush1.msra.mxu0 0.0
        %474 = vmatprep.subr.mxu0 0.0
        %475 = vmatpush1.msra.mxu0 0.0
        %476 = vmatprep.subr.mxu0 0.0
        %477 = vmatpush1.msra.mxu0 0.0
        %478 = vmatprep.subr.mxu0 0.0
        %479 = vmatpush1.msra.mxu0 0.0
        %480 = vmatprep.subr.mxu0 0.0
        %481 = vmatpush1.msra.mxu0 0.0
        %482 = vmatprep.subr.mxu0 0.0
        %483 = vmatpush1.msra.mxu0 0.0
        %484 = vmatprep.subr.mxu0 0.0
        %485 = vmatpush1.msra.mxu0 0.0
        %486 = vmatprep.subr.mxu0 0.0
        %487 = vmatpush1.msra.mxu0 0.0
        %488 = vmatprep.subr.mxu0 0.0
        %489 = vmatpush1.msra.mxu0 0.0
        %490 = vmatprep.subr.mxu0 0.0
        %491 = vmatpush1.msra.mxu0 0.0
        %492 = vmatprep.subr.mxu0 0.0
        %493 = vmatpush1.msra.mxu0 0.0
        %494 = vmatprep.subr.mxu0 0.0
        %495 = vmatpush1.msra.mxu0 0.0
        %496 = vmatprep.subr.mxu0 0.0
        %497 = vmatpush1.msra.mxu0 0.0
        %498 = vmatprep.subr.mxu0 0.0
        %499 = vmatpush1.msra.mxu0 0.0
        %500 = vmatprep.mubr.f32.mxu0 0.0
        %501 = vmatmul.mubr.f32.gmra.mrb[0].mxu0 %v427
        %v502 = vpop.f32.mrb[0].mxu0
        %v503 = vadd.f32 %v423, %v502
        %v504 = vpop.f32.mrb[0].mxu0
        %505 = vmatprep.mubr.f32.mxu0 0.0
        %506 = vmatmul.mubr.f32.gmra.mrb[0].mxu0 %v430
        %v507 = vpop.f32.mrb[0].mxu0
        %v508 = vadd.f32 %v423, %v507
        %v509 = vpop.f32.mrb[0].mxu0
        %510 = vdwg.mxu0
        %v511 = vld [vmem:[#allocation2] sm:$0x1]
        %vm512 = vcmask 326656
        %v513 = vsel %vm512, %v503, 0.0
        %v514 = vsel %vm512, %v508, 0.0
        %v515 = vadd.f32 %v513, %v514
        %v516 = vrot.slane %v515, 4
        %v517 = vadd.f32 %v515, %v516
        %v518 = vrot.slane %v517, 2
        %v519 = vadd.f32 %v517, %v518
        %v520 = vrot.slane %v519, 1
        %v521 = vadd.f32 %v519, %v520
        %v522 = vadd.f32 %v511, %v521
        %vm523 = vcmask 319488
        %524 = vst.msk [vmem:[#allocation2] sm:$0x1] %vm523, %v522
        %v525 = vld [vmem:[#allocation3] sm:$0x1]
        %v526 = vmul.f32 %v503, %v503
        %v527 = vmul.f32 %v508, %v508
        %v528 = vsel %vm512, %v526, 0.0
        %v529 = vsel %vm512, %v527, 0.0
        %v530 = vadd.f32 %v528, %v529
        %v531 = vrot.slane %v530, 4
        %v532 = vadd.f32 %v530, %v531
        %v533 = vrot.slane %v532, 2
        %v534 = vadd.f32 %v532, %v533
        %v535 = vrot.slane %v534, 1
        %v536 = vadd.f32 %v534, %v535
        %v537 = vadd.f32 %v525, %v536
        %538 = vst.msk [vmem:[#allocation3] sm:$0x1] %vm523, %v537
        %vm539 = vcmask 7168
        %540 = vst.msk [vmem:[%s402] sm:$0xff] %vm539, 0.0
        %541 = vst.msk [vmem:[%s402 + $0x8] sm:$0xff] %vm539, 0.0
      $region68: #{tpu_custom_call.1} parent=63 // pred_fallthru
        _
      %p542 = scmp.eq.s32.totalorder %s28, 1
      // Predicated region
      $region73: #{tpu_custom_call.1} parent=63 // pred_check
        %p543 = pneg %p542
      $region74: #{tpu_custom_call.1} parent=63 // pred_check_branch
        %545 = sbr.rel (%p543) target = $region76
      $region75: #{tpu_custom_call.1} parent=63 // pred_region
        %p546 = scmp.eq.s32.totalorder %s29, 0
        // Predicated region
        $region77: #{tpu_custom_call.1} parent=75 // pred_check
          %p547 = pneg %p546
        $region78: #{tpu_custom_call.1} parent=75 // pred_check_branch
          %549 = sbr.rel (%p547) target = $region80
        $region79: #{tpu_custom_call.1} parent=75 // pred_region
          %v550 = vld [vmem:[#allocation2] sm:$0x1]
          %v551 = vmul.f32 %v550, 0.015625
          %v552 = vld [vmem:[#allocation3] sm:$0x1]
          %v553 = vmul.f32 %v552, 0.015625
          %v554 = vmul.f32 %v551, %v551
          %v555 = vsub.f32 %v553, %v554
          %v556 = vmax.f32 %v555, 0.0
          %v557 = vld [vmem:[%s3] sm:$0x1]
          %v558 = vadd.f32 %v556, 1e-05
          %v559 = vrsqrt.pop %v558
          %v560 = vmul.f32 %v557, %v559
          %vm561 = vcmask 319488
          %562 = vst.msk [vmem:[#allocation2] sm:$0x1] %vm561, %v560
          %v563 = vld [vmem:[%s4] sm:$0x1]
          %v564 = vmul.f32 %v551, %v560
          %v565 = vsub.f32 %v563, %v564
          %566 = vst.msk [vmem:[#allocation3] sm:$0x1] %vm561, %v565
          %vm567 = vcmask 155648
          %568 = vst.msk [vmem:[#allocation4] sm:$0x1] %vm567, 0.0
          %569 = vst.msk [vmem:[#allocation5] sm:$0x1] %vm567, 0.0
        $region80: #{tpu_custom_call.1} parent=75 // pred_fallthru
          _
        %v570 = vld [vmem:[%s1] sm:$0xf]
        %v571 = vld [vmem:[%s2] sm:$0x1]
        %v573 = vlaneseq
        %v574 = vshrl.u32 %v573, 7
        %v575 = vsub.s32 0, %v574
        %v576 = vrot.slane %v571, %v575
        %vm578 = vcmask 31744
        %v580 = vsel %vm578, %v404, 0
        %v583 = vsel %vm578, %v405, 0
        %vm585 = vcmask 1043456
        %v587 = vsel %vm585, %v570, 0
        %589 = vmatprep.subr.mxu0 0.0
        %590 = vmatpush1.msra.mxu0 %v587
        %591 = vmatprep.subr.mxu0 0.0
        %592 = vmatpush1.msra.mxu0 0.0
        %593 = vmatprep.subr.mxu0 0.0
        %594 = vmatpush1.msra.mxu0 0.0
        %595 = vmatprep.subr.mxu0 0.0
        %596 = vmatpush1.msra.mxu0 0.0
        %597 = vmatprep.subr.mxu0 0.0
        %598 = vmatpush1.msra.mxu0 0.0
        %599 = vmatprep.subr.mxu0 0.0
        %600 = vmatpush1.msra.mxu0 0.0
        %601 = vmatprep.subr.mxu0 0.0
        %602 = vmatpush1.msra.mxu0 0.0
        %603 = vmatprep.subr.mxu0 0.0
        %604 = vmatpush1.msra.mxu0 0.0
        %605 = vmatprep.subr.mxu0 0.0
        %606 = vmatpush1.msra.mxu0 0.0
        %607 = vmatprep.subr.mxu0 0.0
        %608 = vmatpush1.msra.mxu0 0.0
        %609 = vmatprep.subr.mxu0 0.0
        %610 = vmatpush1.msra.mxu0 0.0
        %611 = vmatprep.subr.mxu0 0.0
        %612 = vmatpush1.msra.mxu0 0.0
        %613 = vmatprep.subr.mxu0 0.0
        %614 = vmatpush1.msra.mxu0 0.0
        %615 = vmatprep.subr.mxu0 0.0
        %616 = vmatpush1.msra.mxu0 0.0
        %617 = vmatprep.subr.mxu0 0.0
        %618 = vmatpush1.msra.mxu0 0.0
        %619 = vmatprep.subr.mxu0 0.0
        %620 = vmatpush1.msra.mxu0 0.0
        %621 = vmatprep.subr.mxu0 0.0
        %622 = vmatpush1.msra.mxu0 0.0
        %623 = vmatprep.subr.mxu0 0.0
        %624 = vmatpush1.msra.mxu0 0.0
        %625 = vmatprep.subr.mxu0 0.0
        %626 = vmatpush1.msra.mxu0 0.0
        %627 = vmatprep.subr.mxu0 0.0
        %628 = vmatpush1.msra.mxu0 0.0
        %629 = vmatprep.subr.mxu0 0.0
        %630 = vmatpush1.msra.mxu0 0.0
        %631 = vmatprep.subr.mxu0 0.0
        %632 = vmatpush1.msra.mxu0 0.0
        %633 = vmatprep.subr.mxu0 0.0
        %634 = vmatpush1.msra.mxu0 0.0
        %635 = vmatprep.subr.mxu0 0.0
        %636 = vmatpush1.msra.mxu0 0.0
        %637 = vmatprep.subr.mxu0 0.0
        %638 = vmatpush1.msra.mxu0 0.0
        %639 = vmatprep.subr.mxu0 0.0
        %640 = vmatpush1.msra.mxu0 0.0
        %641 = vmatprep.subr.mxu0 0.0
        %642 = vmatpush1.msra.mxu0 0.0
        %643 = vmatprep.subr.mxu0 0.0
        %644 = vmatpush1.msra.mxu0 0.0
        %645 = vmatprep.subr.mxu0 0.0
        %646 = vmatpush1.msra.mxu0 0.0
        %647 = vmatprep.subr.mxu0 0.0
        %648 = vmatpush1.msra.mxu0 0.0
        %649 = vmatprep.subr.mxu0 0.0
        %650 = vmatpush1.msra.mxu0 0.0
        %651 = vmatprep.subr.mxu0 0.0
        %652 = vmatpush1.msra.mxu0 0.0
        %653 = vmatprep.mubr.f32.mxu0 0.0
        %654 = vmatmul.mubr.f32.gmra.mrb[0].mxu0 %v580
        %v655 = vpop.f32.mrb[0].mxu0
        %v656 = vadd.f32 %v576, %v655
        %v657 = vpop.f32.mrb[0].mxu0
        %658 = vmatprep.mubr.f32.mxu0 0.0
        %659 = vmatmul.mubr.f32.gmra.mrb[0].mxu0 %v583
        %v660 = vpop.f32.mrb[0].mxu0
        %v661 = vadd.f32 %v576, %v660
        %v662 = vpop.f32.mrb[0].mxu0
        %663 = vdwg.mxu0
        %v664 = vld [vmem:[#allocation2] sm:$0x1]
        %v666 = vlaneseq
        %v667 = vshrl.u32 %v666, 7
        %v668 = vsub.s32 0, %v667
        %v669 = vrot.slane %v664, %v668
        %v671 = vmul.f32 %v656, %v669
        %v672 = vmul.f32 %v661, %v669
        %v673 = vld [vmem:[#allocation3] sm:$0x1]
        %v675 = vlaneseq
        %v676 = vshrl.u32 %v675, 7
        %v677 = vsub.s32 0, %v676
        %v678 = vrot.slane %v673, %v677
        %v680 = vadd.f32 %v671, %v678
        %v681 = vadd.f32 %v672, %v678
        %v682 = vmax.f32 %v680, 0.0
        %v683 = vmax.f32 %v681, 0.0
        %v684 = vld [vmem:[%s5] sm:$0xff]
        %v685 = vld [vmem:[%s5 + $0x8] sm:$0xff]
        %v686 = vld [vmem:[%s5 + $0x10] sm:$0xff]
        %v687 = vld [vmem:[%s5 + $0x18] sm:$0xff]
        %v688 = vld [vmem:[%s5 + $0x20] sm:$0xff]
        %v689 = vld [vmem:[%s6] sm:$0x1]
        %v691 = vlaneseq
        %v692 = vshrl.u32 %v691, 7
        %v693 = vsub.s32 0, %v692
        %v694 = vrot.slane %v689, %v693
        %vm696 = vcmask 326656
        %v698 = vsel %vm696, %v682, 0
        %v701 = vsel %vm696, %v683, 0
        %703 = vmatprep.subr.mxu0 0.0
        %704 = vmatpush1.msra.mxu0 %v684
        %705 = vmatprep.subr.mxu0 0.0
        %706 = vmatpush1.msra.mxu0 %v685
        %707 = vmatprep.subr.mxu0 0.0
        %708 = vmatpush1.msra.mxu0 %v686
        %709 = vmatprep.subr.mxu0 0.0
        %710 = vmatpush1.msra.mxu0 %v687
        %711 = vmatprep.subr.mxu0 0.0
        %712 = vmatpush1.msra.mxu0 %v688
        %713 = vmatprep.subr.mxu0 0.0
        %714 = vmatpush1.msra.mxu0 0.0
        %715 = vmatprep.subr.mxu0 0.0
        %716 = vmatpush1.msra.mxu0 0.0
        %717 = vmatprep.subr.mxu0 0.0
        %718 = vmatpush1.msra.mxu0 0.0
        %719 = vmatprep.subr.mxu0 0.0
        %720 = vmatpush1.msra.mxu0 0.0
        %721 = vmatprep.subr.mxu0 0.0
        %722 = vmatpush1.msra.mxu0 0.0
        %723 = vmatprep.subr.mxu0 0.0
        %724 = vmatpush1.msra.mxu0 0.0
        %725 = vmatprep.subr.mxu0 0.0
        %726 = vmatpush1.msra.mxu0 0.0
        %727 = vmatprep.subr.mxu0 0.0
        %728 = vmatpush1.msra.mxu0 0.0
        %729 = vmatprep.subr.mxu0 0.0
        %730 = vmatpush1.msra.mxu0 0.0
        %731 = vmatprep.subr.mxu0 0.0
        %732 = vmatpush1.msra.mxu0 0.0
        %733 = vmatprep.subr.mxu0 0.0
        %734 = vmatpush1.msra.mxu0 0.0
        %735 = vmatprep.subr.mxu0 0.0
        %736 = vmatpush1.msra.mxu0 0.0
        %737 = vmatprep.subr.mxu0 0.0
        %738 = vmatpush1.msra.mxu0 0.0
        %739 = vmatprep.subr.mxu0 0.0
        %740 = vmatpush1.msra.mxu0 0.0
        %741 = vmatprep.subr.mxu0 0.0
        %742 = vmatpush1.msra.mxu0 0.0
        %743 = vmatprep.subr.mxu0 0.0
        %744 = vmatpush1.msra.mxu0 0.0
        %745 = vmatprep.subr.mxu0 0.0
        %746 = vmatpush1.msra.mxu0 0.0
        %747 = vmatprep.subr.mxu0 0.0
        %748 = vmatpush1.msra.mxu0 0.0
        %749 = vmatprep.subr.mxu0 0.0
        %750 = vmatpush1.msra.mxu0 0.0
        %751 = vmatprep.subr.mxu0 0.0
        %752 = vmatpush1.msra.mxu0 0.0
        %753 = vmatprep.subr.mxu0 0.0
        %754 = vmatpush1.msra.mxu0 0.0
        %755 = vmatprep.subr.mxu0 0.0
        %756 = vmatpush1.msra.mxu0 0.0
        %757 = vmatprep.subr.mxu0 0.0
        %758 = vmatpush1.msra.mxu0 0.0
        %759 = vmatprep.subr.mxu0 0.0
        %760 = vmatpush1.msra.mxu0 0.0
        %761 = vmatprep.subr.mxu0 0.0
        %762 = vmatpush1.msra.mxu0 0.0
        %763 = vmatprep.subr.mxu0 0.0
        %764 = vmatpush1.msra.mxu0 0.0
        %765 = vmatprep.subr.mxu0 0.0
        %766 = vmatpush1.msra.mxu0 0.0
        %767 = vmatprep.mubr.f32.mxu0 0.0
        %768 = vmatmul.mubr.f32.gmra.mrb[0].mxu0 %v698
        %v769 = vpop.f32.mrb[0].mxu0
        %v770 = vadd.f32 %v694, %v769
        %v771 = vpop.f32.mrb[0].mxu0
        %772 = vmatprep.mubr.f32.mxu0 0.0
        %773 = vmatmul.mubr.f32.gmra.mrb[0].mxu0 %v701
        %v774 = vpop.f32.mrb[0].mxu0
        %v775 = vadd.f32 %v694, %v774
        %v776 = vpop.f32.mrb[0].mxu0
        %777 = vdwg.mxu0
        %v778 = vld [vmem:[#allocation4] sm:$0x1]
        %vm779 = vcmask 162816
        %v780 = vsel %vm779, %v770, 0.0
        %v781 = vsel %vm779, %v775, 0.0
        %v782 = vadd.f32 %v780, %v781
        %v783 = vrot.slane %v782, 4
        %v784 = vadd.f32 %v782, %v783
        %v785 = vrot.slane %v784, 2
        %v786 = vadd.f32 %v784, %v785
        %v787 = vrot.slane %v786, 1
        %v788 = vadd.f32 %v786, %v787
        %v789 = vadd.f32 %v778, %v788
        %vm790 = vcmask 155648
        %791 = vst.msk [vmem:[#allocation4] sm:$0x1] %vm790, %v789
        %v792 = vld [vmem:[#allocation5] sm:$0x1]
        %v793 = vmul.f32 %v770, %v770
        %v794 = vmul.f32 %v775, %v775
        %v795 = vsel %vm779, %v793, 0.0
        %v796 = vsel %vm779, %v794, 0.0
        %v797 = vadd.f32 %v795, %v796
        %v798 = vrot.slane %v797, 4
        %v799 = vadd.f32 %v797, %v798
        %v800 = vrot.slane %v799, 2
        %v801 = vadd.f32 %v799, %v800
        %v802 = vrot.slane %v801, 1
        %v803 = vadd.f32 %v801, %v802
        %v804 = vadd.f32 %v792, %v803
        %805 = vst.msk [vmem:[#allocation5] sm:$0x1] %vm790, %v804
        %vm806 = vcmask 7168
        %807 = vst.msk [vmem:[%s402] sm:$0xff] %vm806, 0.0
        %808 = vst.msk [vmem:[%s402 + $0x8] sm:$0xff] %vm806, 0.0
      $region76: #{tpu_custom_call.1} parent=63 // pred_fallthru
        _
      %p809 = scmp.eq.s32.totalorder %s28, 2
      // Predicated region
      $region81: #{tpu_custom_call.1} parent=63 // pred_check
        %p810 = pneg %p809
      $region82: #{tpu_custom_call.1} parent=63 // pred_check_branch
        %812 = sbr.rel (%p810) target = $region84
      $region83: #{tpu_custom_call.1} parent=63 // pred_region
        %p813 = scmp.eq.s32.totalorder %s29, 0
        // Predicated region
        $region85: #{tpu_custom_call.1} parent=83 // pred_check
          %p814 = pneg %p813
        $region86: #{tpu_custom_call.1} parent=83 // pred_check_branch
          %816 = sbr.rel (%p814) target = $region88
        $region87: #{tpu_custom_call.1} parent=83 // pred_region
          %v817 = vld [vmem:[#allocation4] sm:$0x1]
          %v818 = vmul.f32 %v817, 0.015625
          %v819 = vld [vmem:[#allocation5] sm:$0x1]
          %v820 = vmul.f32 %v819, 0.015625
          %v821 = vmul.f32 %v818, %v818
          %v822 = vsub.f32 %v820, %v821
          %v823 = vmax.f32 %v822, 0.0
          %v824 = vld [vmem:[%s7] sm:$0x1]
          %v825 = vadd.f32 %v823, 1e-05
          %v826 = vrsqrt.pop %v825
          %v827 = vmul.f32 %v824, %v826
          %vm828 = vcmask 155648
          %829 = vst.msk [vmem:[#allocation4] sm:$0x1] %vm828, %v827
          %v830 = vld [vmem:[%s8] sm:$0x1]
          %v831 = vmul.f32 %v818, %v827
          %v832 = vsub.f32 %v830, %v831
          %833 = vst.msk [vmem:[#allocation5] sm:$0x1] %vm828, %v832
        $region88: #{tpu_custom_call.1} parent=83 // pred_fallthru
          _
        %v834 = vld [vmem:[%s1] sm:$0xf]
        %v835 = vld [vmem:[%s2] sm:$0x1]
        %v837 = vlaneseq
        %v838 = vshrl.u32 %v837, 7
        %v839 = vsub.s32 0, %v838
        %v840 = vrot.slane %v835, %v839
        %vm842 = vcmask 31744
        %v844 = vsel %vm842, %v404, 0
        %v847 = vsel %vm842, %v405, 0
        %vm849 = vcmask 1043456
        %v851 = vsel %vm849, %v834, 0
        %853 = vmatprep.subr.mxu0 0.0
        %854 = vmatpush1.msra.mxu0 %v851
        %855 = vmatprep.subr.mxu0 0.0
        %856 = vmatpush1.msra.mxu0 0.0
        %857 = vmatprep.subr.mxu0 0.0
        %858 = vmatpush1.msra.mxu0 0.0
        %859 = vmatprep.subr.mxu0 0.0
        %860 = vmatpush1.msra.mxu0 0.0
        %861 = vmatprep.subr.mxu0 0.0
        %862 = vmatpush1.msra.mxu0 0.0
        %863 = vmatprep.subr.mxu0 0.0
        %864 = vmatpush1.msra.mxu0 0.0
        %865 = vmatprep.subr.mxu0 0.0
        %866 = vmatpush1.msra.mxu0 0.0
        %867 = vmatprep.subr.mxu0 0.0
        %868 = vmatpush1.msra.mxu0 0.0
        %869 = vmatprep.subr.mxu0 0.0
        %870 = vmatpush1.msra.mxu0 0.0
        %871 = vmatprep.subr.mxu0 0.0
        %872 = vmatpush1.msra.mxu0 0.0
        %873 = vmatprep.subr.mxu0 0.0
        %874 = vmatpush1.msra.mxu0 0.0
        %875 = vmatprep.subr.mxu0 0.0
        %876 = vmatpush1.msra.mxu0 0.0
        %877 = vmatprep.subr.mxu0 0.0
        %878 = vmatpush1.msra.mxu0 0.0
        %879 = vmatprep.subr.mxu0 0.0
        %880 = vmatpush1.msra.mxu0 0.0
        %881 = vmatprep.subr.mxu0 0.0
        %882 = vmatpush1.msra.mxu0 0.0
        %883 = vmatprep.subr.mxu0 0.0
        %884 = vmatpush1.msra.mxu0 0.0
        %885 = vmatprep.subr.mxu0 0.0
        %886 = vmatpush1.msra.mxu0 0.0
        %887 = vmatprep.subr.mxu0 0.0
        %888 = vmatpush1.msra.mxu0 0.0
        %889 = vmatprep.subr.mxu0 0.0
        %890 = vmatpush1.msra.mxu0 0.0
        %891 = vmatprep.subr.mxu0 0.0
        %892 = vmatpush1.msra.mxu0 0.0
        %893 = vmatprep.subr.mxu0 0.0
        %894 = vmatpush1.msra.mxu0 0.0
        %895 = vmatprep.subr.mxu0 0.0
        %896 = vmatpush1.msra.mxu0 0.0
        %897 = vmatprep.subr.mxu0 0.0
        %898 = vmatpush1.msra.mxu0 0.0
        %899 = vmatprep.subr.mxu0 0.0
        %900 = vmatpush1.msra.mxu0 0.0
        %901 = vmatprep.subr.mxu0 0.0
        %902 = vmatpush1.msra.mxu0 0.0
        %903 = vmatprep.subr.mxu0 0.0
        %904 = vmatpush1.msra.mxu0 0.0
        %905 = vmatprep.subr.mxu0 0.0
        %906 = vmatpush1.msra.mxu0 0.0
        %907 = vmatprep.subr.mxu0 0.0
        %908 = vmatpush1.msra.mxu0 0.0
        %909 = vmatprep.subr.mxu0 0.0
        %910 = vmatpush1.msra.mxu0 0.0
        %911 = vmatprep.subr.mxu0 0.0
        %912 = vmatpush1.msra.mxu0 0.0
        %913 = vmatprep.subr.mxu0 0.0
        %914 = vmatpush1.msra.mxu0 0.0
        %915 = vmatprep.subr.mxu0 0.0
        %916 = vmatpush1.msra.mxu0 0.0
        %917 = vmatprep.mubr.f32.mxu0 0.0
        %918 = vmatmul.mubr.f32.gmra.mrb[0].mxu0 %v844
        %v919 = vpop.f32.mrb[0].mxu0
        %v920 = vadd.f32 %v840, %v919
        %v921 = vpop.f32.mrb[0].mxu0
        %922 = vmatprep.mubr.f32.mxu0 0.0
        %923 = vmatmul.mubr.f32.gmra.mrb[0].mxu0 %v847
        %v924 = vpop.f32.mrb[0].mxu0
        %v925 = vadd.f32 %v840, %v924
        %v926 = vpop.f32.mrb[0].mxu0
        %927 = vdwg.mxu0
        %v928 = vld [vmem:[#allocation2] sm:$0x1]
        %v930 = vlaneseq
        %v931 = vshrl.u32 %v930, 7
        %v932 = vsub.s32 0, %v931
        %v933 = vrot.slane %v928, %v932
        %v935 = vmul.f32 %v920, %v933
        %v936 = vmul.f32 %v925, %v933
        %v937 = vld [vmem:[#allocation3] sm:$0x1]
        %v939 = vlaneseq
        %v940 = vshrl.u32 %v939, 7
        %v941 = vsub.s32 0, %v940
        %v942 = vrot.slane %v937, %v941
        %v944 = vadd.f32 %v935, %v942
        %v945 = vadd.f32 %v936, %v942
        %v946 = vmax.f32 %v944, 0.0
        %v947 = vmax.f32 %v945, 0.0
        %v948 = vld [vmem:[%s5] sm:$0xff]
        %v949 = vld [vmem:[%s5 + $0x8] sm:$0xff]
        %v950 = vld [vmem:[%s5 + $0x10] sm:$0xff]
        %v951 = vld [vmem:[%s5 + $0x18] sm:$0xff]
        %v952 = vld [vmem:[%s5 + $0x20] sm:$0xff]
        %v953 = vld [vmem:[%s6] sm:$0x1]
        %v955 = vlaneseq
        %v956 = vshrl.u32 %v955, 7
        %v957 = vsub.s32 0, %v956
        %v958 = vrot.slane %v953, %v957
        %vm960 = vcmask 326656
        %v962 = vsel %vm960, %v946, 0
        %v965 = vsel %vm960, %v947, 0
        %967 = vmatprep.subr.mxu0 0.0
        %968 = vmatpush1.msra.mxu0 %v948
        %969 = vmatprep.subr.mxu0 0.0
        %970 = vmatpush1.msra.mxu0 %v949
        %971 = vmatprep.subr.mxu0 0.0
        %972 = vmatpush1.msra.mxu0 %v950
        %973 = vmatprep.subr.mxu0 0.0
        %974 = vmatpush1.msra.mxu0 %v951
        %975 = vmatprep.subr.mxu0 0.0
        %976 = vmatpush1.msra.mxu0 %v952
        %977 = vmatprep.subr.mxu0 0.0
        %978 = vmatpush1.msra.mxu0 0.0
        %979 = vmatprep.subr.mxu0 0.0
        %980 = vmatpush1.msra.mxu0 0.0
        %981 = vmatprep.subr.mxu0 0.0
        %982 = vmatpush1.msra.mxu0 0.0
        %983 = vmatprep.subr.mxu0 0.0
        %984 = vmatpush1.msra.mxu0 0.0
        %985 = vmatprep.subr.mxu0 0.0
        %986 = vmatpush1.msra.mxu0 0.0
        %987 = vmatprep.subr.mxu0 0.0
        %988 = vmatpush1.msra.mxu0 0.0
        %989 = vmatprep.subr.mxu0 0.0
        %990 = vmatpush1.msra.mxu0 0.0
        %991 = vmatprep.subr.mxu0 0.0
        %992 = vmatpush1.msra.mxu0 0.0
        %993 = vmatprep.subr.mxu0 0.0
        %994 = vmatpush1.msra.mxu0 0.0
        %995 = vmatprep.subr.mxu0 0.0
        %996 = vmatpush1.msra.mxu0 0.0
        %997 = vmatprep.subr.mxu0 0.0
        %998 = vmatpush1.msra.mxu0 0.0
        %999 = vmatprep.subr.mxu0 0.0
        %1000 = vmatpush1.msra.mxu0 0.0
        %1001 = vmatprep.subr.mxu0 0.0
        %1002 = vmatpush1.msra.mxu0 0.0
        %1003 = vmatprep.subr.mxu0 0.0
        %1004 = vmatpush1.msra.mxu0 0.0
        %1005 = vmatprep.subr.mxu0 0.0
        %1006 = vmatpush1.msra.mxu0 0.0
        %1007 = vmatprep.subr.mxu0 0.0
        %1008 = vmatpush1.msra.mxu0 0.0
        %1009 = vmatprep.subr.mxu0 0.0
        %1010 = vmatpush1.msra.mxu0 0.0
        %1011 = vmatprep.subr.mxu0 0.0
        %1012 = vmatpush1.msra.mxu0 0.0
        %1013 = vmatprep.subr.mxu0 0.0
        %1014 = vmatpush1.msra.mxu0 0.0
        %1015 = vmatprep.subr.mxu0 0.0
        %1016 = vmatpush1.msra.mxu0 0.0
        %1017 = vmatprep.subr.mxu0 0.0
        %1018 = vmatpush1.msra.mxu0 0.0
        %1019 = vmatprep.subr.mxu0 0.0
        %1020 = vmatpush1.msra.mxu0 0.0
        %1021 = vmatprep.subr.mxu0 0.0
        %1022 = vmatpush1.msra.mxu0 0.0
        %1023 = vmatprep.subr.mxu0 0.0
        %1024 = vmatpush1.msra.mxu0 0.0
        %1025 = vmatprep.subr.mxu0 0.0
        %1026 = vmatpush1.msra.mxu0 0.0
        %1027 = vmatprep.subr.mxu0 0.0
        %1028 = vmatpush1.msra.mxu0 0.0
        %1029 = vmatprep.subr.mxu0 0.0
        %1030 = vmatpush1.msra.mxu0 0.0
        %1031 = vmatprep.mubr.f32.mxu0 0.0
        %1032 = vmatmul.mubr.f32.gmra.mrb[0].mxu0 %v962
        %v1033 = vpop.f32.mrb[0].mxu0
        %v1034 = vadd.f32 %v958, %v1033
        %v1035 = vpop.f32.mrb[0].mxu0
        %1036 = vmatprep.mubr.f32.mxu0 0.0
        %1037 = vmatmul.mubr.f32.gmra.mrb[0].mxu0 %v965
        %v1038 = vpop.f32.mrb[0].mxu0
        %v1039 = vadd.f32 %v958, %v1038
        %v1040 = vpop.f32.mrb[0].mxu0
        %1041 = vdwg.mxu0
        %v1042 = vld [vmem:[#allocation4] sm:$0x1]
        %v1044 = vlaneseq
        %v1045 = vshrl.u32 %v1044, 7
        %v1046 = vsub.s32 0, %v1045
        %v1047 = vrot.slane %v1042, %v1046
        %v1049 = vmul.f32 %v1034, %v1047
        %v1050 = vmul.f32 %v1039, %v1047
        %v1051 = vld [vmem:[#allocation5] sm:$0x1]
        %v1053 = vlaneseq
        %v1054 = vshrl.u32 %v1053, 7
        %v1055 = vsub.s32 0, %v1054
        %v1056 = vrot.slane %v1051, %v1055
        %v1058 = vadd.f32 %v1049, %v1056
        %v1059 = vadd.f32 %v1050, %v1056
        %v1060 = vmax.f32 %v1058, 0.0
        %v1061 = vmax.f32 %v1059, 0.0
        %v1062 = vld [vmem:[%s9] sm:$0xff]
        %v1063 = vld [vmem:[%s9 + $0x8] sm:$0xff]
        %v1064 = vld [vmem:[%s9 + $0x10] sm:$0xf]
        %v1065 = vld [vmem:[#allocation6] sm:$0x1]
        %v1067 = vlaneseq
        %v1068 = vshrl.u32 %v1067, 7
        %v1069 = vsub.s32 0, %v1068
        %v1070 = vrot.slane %v1065, %v1069
        %vm1072 = vcmask 162816
        %v1074 = vsel %vm1072, %v1060, 0
        %v1077 = vsel %vm1072, %v1061, 0
        %v1080 = vsel %vm849, %v1064, 0
        %1082 = vmatprep.subr.mxu0 0.0
        %1083 = vmatpush1.msra.mxu0 %v1062
        %1084 = vmatprep.subr.mxu0 0.0
        %1085 = vmatpush1.msra.mxu0 %v1063
        %1086 = vmatprep.subr.mxu0 0.0
        %1087 = vmatpush1.msra.mxu0 %v1080
        %1088 = vmatprep.subr.mxu0 0.0
        %1089 = vmatpush1.msra.mxu0 0.0
        %1090 = vmatprep.subr.mxu0 0.0
        %1091 = vmatpush1.msra.mxu0 0.0
        %1092 = vmatprep.subr.mxu0 0.0
        %1093 = vmatpush1.msra.mxu0 0.0
        %1094 = vmatprep.subr.mxu0 0.0
        %1095 = vmatpush1.msra.mxu0 0.0
        %1096 = vmatprep.subr.mxu0 0.0
        %1097 = vmatpush1.msra.mxu0 0.0
        %1098 = vmatprep.subr.mxu0 0.0
        %1099 = vmatpush1.msra.mxu0 0.0
        %1100 = vmatprep.subr.mxu0 0.0
        %1101 = vmatpush1.msra.mxu0 0.0
        %1102 = vmatprep.subr.mxu0 0.0
        %1103 = vmatpush1.msra.mxu0 0.0
        %1104 = vmatprep.subr.mxu0 0.0
        %1105 = vmatpush1.msra.mxu0 0.0
        %1106 = vmatprep.subr.mxu0 0.0
        %1107 = vmatpush1.msra.mxu0 0.0
        %1108 = vmatprep.subr.mxu0 0.0
        %1109 = vmatpush1.msra.mxu0 0.0
        %1110 = vmatprep.subr.mxu0 0.0
        %1111 = vmatpush1.msra.mxu0 0.0
        %1112 = vmatprep.subr.mxu0 0.0
        %1113 = vmatpush1.msra.mxu0 0.0
        %1114 = vmatprep.subr.mxu0 0.0
        %1115 = vmatpush1.msra.mxu0 0.0
        %1116 = vmatprep.subr.mxu0 0.0
        %1117 = vmatpush1.msra.mxu0 0.0
        %1118 = vmatprep.subr.mxu0 0.0
        %1119 = vmatpush1.msra.mxu0 0.0
        %1120 = vmatprep.subr.mxu0 0.0
        %1121 = vmatpush1.msra.mxu0 0.0
        %1122 = vmatprep.subr.mxu0 0.0
        %1123 = vmatpush1.msra.mxu0 0.0
        %1124 = vmatprep.subr.mxu0 0.0
        %1125 = vmatpush1.msra.mxu0 0.0
        %1126 = vmatprep.subr.mxu0 0.0
        %1127 = vmatpush1.msra.mxu0 0.0
        %1128 = vmatprep.subr.mxu0 0.0
        %1129 = vmatpush1.msra.mxu0 0.0
        %1130 = vmatprep.subr.mxu0 0.0
        %1131 = vmatpush1.msra.mxu0 0.0
        %1132 = vmatprep.subr.mxu0 0.0
        %1133 = vmatpush1.msra.mxu0 0.0
        %1134 = vmatprep.subr.mxu0 0.0
        %1135 = vmatpush1.msra.mxu0 0.0
        %1136 = vmatprep.subr.mxu0 0.0
        %1137 = vmatpush1.msra.mxu0 0.0
        %1138 = vmatprep.subr.mxu0 0.0
        %1139 = vmatpush1.msra.mxu0 0.0
        %1140 = vmatprep.subr.mxu0 0.0
        %1141 = vmatpush1.msra.mxu0 0.0
        %1142 = vmatprep.subr.mxu0 0.0
        %1143 = vmatpush1.msra.mxu0 0.0
        %1144 = vmatprep.subr.mxu0 0.0
        %1145 = vmatpush1.msra.mxu0 0.0
        %1146 = vmatprep.mubr.f32.mxu0 0.0
        %1147 = vmatmul.mubr.f32.gmra.mrb[0].mxu0 %v1074
        %v1148 = vpop.f32.mrb[0].mxu0
        %v1149 = vadd.f32 %v1070, %v1148
        %v1150 = vpop.f32.mrb[0].mxu0
        %1151 = vmatprep.mubr.f32.mxu0 0.0
        %1152 = vmatmul.mubr.f32.gmra.mrb[0].mxu0 %v1077
        %v1153 = vpop.f32.mrb[0].mxu0
        %v1154 = vadd.f32 %v1070, %v1153
        %v1155 = vpop.f32.mrb[0].mxu0
        %1156 = vdwg.mxu0
        %v1157 = vtanh.pop %v1149
        %v1158 = vtanh.pop %v1154
        %vm1159 = vcmask 7168
        %1160 = vst.msk [vmem:[%s402] sm:$0xff] %vm1159, %v1157
        %1161 = vst.msk [vmem:[%s402 + $0x8] sm:$0xff] %vm1159, %v1158
      $region84: #{tpu_custom_call.1} parent=63 // pred_fallthru
        _
      %s1162 = smul.u32 2, %s29
      %p1163 = scmp.lt.s32.totalorder %s1162, 7
      %s1164 = scalar_select %p1163, %s1162, 7
      %s1165 = smul.addr %s1164, 8
      %s1166 = scalar_lea.vmem %s11, %s1165
      // Predicated region
      $region89: #{tpu_custom_call.1} parent=63 // pred_check
        %p1167 = pneg %p290
      $region90: #{tpu_custom_call.1} parent=63 // pred_check_branch
        %1169 = sbr.rel (%p1167) target = $region92
      $region91: #{tpu_custom_call.1} parent=63 // pred_region
        %s1170 = smul.u32 2, %s29
      $region92: #{tpu_custom_call.1} parent=63 // pred_fallthru
        _
    $region64: #{tpu_custom_call.1} parent=5 // pred_fallthru
      _
    %p1171 = scmp.le.s32.totalorder 2, %s19
    // Predicated region
    $region93: #{tpu_custom_call.1} parent=5 // pred_check
      %p1172 = pneg %p1171
    $region94: #{tpu_custom_call.1} parent=5 // pred_check_branch
      %1174 = sbr.rel (%p1172) target = $region96
    $region95: #{tpu_custom_call.1} parent=5 // pred_region
      %s1175 = ssub.s32 %s19, 2
      // Predicated region
      $region97: #{tpu_custom_call.1} parent=95 // pred_check
        %p1176 = pneg %p296
      $region98: #{tpu_custom_call.1} parent=95 // pred_check_branch
        %1178 = sbr.rel (%p1176) target = $region100
      $region99: #{tpu_custom_call.1} parent=95 // pred_region
        %s1179 = smul.u32 2, %s31
        %p1180 = scmp.lt.s32.totalorder %s1179, 7
        %s1181 = scalar_select %p1180, %s1179, 7
        %s1182 = smul.addr %s1181, 8
        %s1183 = scalar_lea.vmem %s11, %s1182
      $region100: #{tpu_custom_call.1} parent=95 // pred_fallthru
        _
    $region96: #{tpu_custom_call.1} parent=5 // pred_fallthru
      _
  $region6: #{tpu_custom_call.1} parent=0 // loop_footer
    %s23 = sadd.s32 1, %s19
  $region7: #{tpu_custom_call.1} parent=0 // loop_footer_branch
    %18 = sbr.rel target = $region3
  $region8: #{tpu_custom_call.1} parent=0 // loop_exit
    _

</llo_original>
